<compile_context>
chip_gen: v7x
topology: tpu7x:2x2x1
jax: 0.10.0
libtpu: 0.0.40
codegen_flags: <defaults>
</compile_context>

<pallas_src>
import functools
import math

import jax
import jax.numpy as jnp
from jax import lax
from jax.experimental import pallas as pl
from jax.experimental.pallas import tpu as pltpu


# ----------------------------------------------------------------------------
# In-kernel helpers
# ----------------------------------------------------------------------------
def _softmax_rows(s):
    """Numerically-stable row softmax; normalization on the EUP (approx recip)."""
    m = jnp.max(s, axis=-1, keepdims=True)
    e = jnp.exp(s - m)
    return e * pl.reciprocal(jnp.sum(e, axis=-1, keepdims=True), approx=True)


# ----------------------------------------------------------------------------
# Fused self-attention (MultiHeadedAttention) + output MLP.  One batch / step.
# ----------------------------------------------------------------------------
def _self_fused_kernel(x_ref, src_ref, wq_ref, bq_ref, wkv_ref, bkv_ref,
                       wm_ref, bm_ref, w1_ref, b1_ref, w2_ref, b2_ref,
                       out_ref, scores_ref, *, num_heads, head_dim):
    f32 = jnp.float32
    d_model = num_heads * head_dim
    x = x_ref[0]          # (N, D)
    src = src_ref[0]      # (M, D)
    n = x.shape[0]
    m = src.shape[0]

    # Projections (head-contiguous because the weight columns were permuted).
    q = jnp.dot(x, wq_ref[...], preferred_element_type=f32) + bq_ref[...]       # (N, D)
    kv = jnp.dot(src, wkv_ref[...], preferred_element_type=f32) + bkv_ref[...]  # (M, 2D)

    wm = wm_ref[...]
    scale = 1.0 / math.sqrt(head_dim)
    contract_last = (((1,), (1,)), ((), ()))          # (n,d) x (m,d) -> (n,m)

    msg = jnp.zeros((n, d_model), f32)
    score_sum = jnp.zeros((n, m), f32)
    for h in range(num_heads):                        # static unroll (H is small)
        lo = h * head_dim
        qh = q[:, lo:lo + head_dim]                   # (N, dh)
        kh = kv[:, lo:lo + head_dim]                  # (M, dh)
        vh = kv[:, d_model + lo:d_model + lo + head_dim]
        s = lax.dot_general(qh, kh, contract_last,
                            preferred_element_type=f32) * scale    # (N, M)
        score_sum = score_sum + s
        p = _softmax_rows(s)
        oh = jnp.dot(p, vh, preferred_element_type=f32)            # (N, dh)
        # merge matmul decomposed per head (row block of the merge weight)
        msg = msg + jnp.dot(oh, wm[lo:lo + head_dim, :], preferred_element_type=f32)
    msg = msg + bm_ref[...]

    # Output MLP on cat([x, msg]) without materializing the concat.
    w1 = w1_ref[...]
    h1 = (jnp.dot(x, w1[:d_model, :], preferred_element_type=f32)
          + jnp.dot(msg, w1[d_model:, :], preferred_element_type=f32)
          + b1_ref[...])
    h1 = jnp.maximum(h1, 0.0)
    out = jnp.dot(h1, w2_ref[...], preferred_element_type=f32) + b2_ref[...]

    out_ref[0] = out.astype(out_ref.dtype)
    scores_ref[0] = (score_sum * (1.0 / num_heads)).astype(scores_ref.dtype)


# ----------------------------------------------------------------------------
# Fused cross-attention (MLPAttention) + output MLP.  One batch / step.
# ----------------------------------------------------------------------------
def _cross_fused_kernel(x_ref, src_ref, dist_ref, w1q_ref, w1k_ref, w1d_ref,
                        b1a_ref, w2a_ref, w1_ref, b1_ref, w2_ref, b2_ref,
                        out_ref, scores_ref, *, n, m, d):
    f32 = jnp.float32
    x = x_ref[0]          # (N, D)
    src = src_ref[0]      # (M, D)
    dist = dist_ref[0]    # (N*M, D), row r = i*M + j

    # attn l1 without the (N*M, 3D) concat: per-query, per-key and per-pair terms.
    aq = jnp.dot(x, w1q_ref[...], preferred_element_type=f32) + b1a_ref[...]   # (N, D)
    ak = jnp.dot(src, w1k_ref[...], preferred_element_type=f32)                # (M, D)
    ad = jnp.dot(dist, w1d_ref[...], preferred_element_type=f32)               # (N*M, D)
    h = jnp.maximum(aq[:, None, :] + ak[None, :, :] + ad.reshape(n, m, d), 0.0)  # (N,M,D)

    # attn l2 (D -> 1) as a lane reduction; its bias is a constant score shift
    # (softmax-invariant) and is added to the returned weights outside the kernel.
    scores = jnp.sum(h * w2a_ref[...].reshape(1, 1, d), axis=-1)               # (N, M)

    p = _softmax_rows(scores)
    msg = jnp.dot(p, src, preferred_element_type=f32)                          # (N, D)

    # Output MLP on cat([x, msg]) without materializing the concat.
    w1 = w1_ref[...]
    h1 = (jnp.dot(x, w1[:d, :], preferred_element_type=f32)
          + jnp.dot(msg, w1[d:, :], preferred_element_type=f32)
          + b1_ref[...])
    h1 = jnp.maximum(h1, 0.0)
    out = jnp.dot(h1, w2_ref[...], preferred_element_type=f32) + b2_ref[...]

    out_ref[0] = out.astype(out_ref.dtype)
    scores_ref[0] = scores.astype(scores_ref.dtype)


# ----------------------------------------------------------------------------
# Trace-time weight re-layout (cheap reshapes/transposes on (D,D) weights).
# torch .view(b, dim, heads, L): proj output channel c = d*heads + h.
# We move to head-contiguous channels c' = h*dim + d.
# ----------------------------------------------------------------------------
def _permute_head_cols(w, num_heads, head_dim):
    cin, dmod = w.shape
    return w.reshape(cin, head_dim, num_heads).transpose(0, 2, 1).reshape(cin, dmod)


def _permute_head_vec(b, num_heads, head_dim):
    return b.reshape(head_dim, num_heads).T.reshape(-1)


def _permute_head_rows(w, num_heads, head_dim):
    dmod, cout = w.shape
    return w.reshape(head_dim, num_heads, cout).transpose(1, 0, 2).reshape(dmod, cout)


# ----------------------------------------------------------------------------
# AttentionalPropagation forward (one fused pallas_call, grid over batch)
# ----------------------------------------------------------------------------
def attentional_propagation(params, x, source, dist=None, mask=None, *,
                            attn_type="self", num_heads=4):
    """x:(B,D,N) source:(B,D,M) dist:(B,D,N*M) (cross only).  Returns
    (out:(B,D,N), weights:(B,N,M)) matching the PyTorch module."""
    # TODO(synk): mask branches (float median/clamp rescale, boolean additive
    # mask) are not implemented; only the mask=None path is supported.
    assert mask is None
    B, D, N = x.shape
    M = source.shape[2]
    x_lc = jnp.transpose(x, (0, 2, 1))        # (B, N, D)
    s_lc = jnp.transpose(source, (0, 2, 1))   # (B, M, D)

    mlp = params["mlp"]
    w1_mlp = mlp["l1"]["w"]                   # (2D, 2D)
    b1_mlp = mlp["l1"]["b"].reshape(1, 2 * D)
    w2_mlp = mlp["l2"]["w"]                   # (2D, D)
    b2_mlp = mlp["l2"]["b"].reshape(1, D)

    full2d = lambda shape: pl.BlockSpec(shape, lambda b: (0, 0))
    per_b = lambda shape: pl.BlockSpec(shape, lambda b: (b, 0, 0))
    cparams = pltpu.CompilerParams(dimension_semantics=("parallel",))
    out_shapes = (jax.ShapeDtypeStruct((B, N, D), jnp.float32),
                  jax.ShapeDtypeStruct((B, N, M), jnp.float32))
    out_specs = (per_b((1, N, D)), per_b((1, N, M)))

    if attn_type == "cross":
        p = params["attn"]
        dist_lc = jnp.transpose(dist, (0, 2, 1))   # (B, N*M, D)
        w1a = p["l1"]["w"]                          # (3D, D): rows = [query, key, dist]
        out, scores = pl.pallas_call(
            functools.partial(_cross_fused_kernel, n=N, m=M, d=D),
            grid=(B,),
            out_shape=out_shapes,
            in_specs=[
                per_b((1, N, D)), per_b((1, M, D)), per_b((1, N * M, D)),
                full2d((D, D)), full2d((D, D)), full2d((D, D)),
                full2d((1, D)), full2d((1, D)),
                full2d((2 * D, 2 * D)), full2d((1, 2 * D)),
                full2d((2 * D, D)), full2d((1, D)),
            ],
            out_specs=out_specs,
            compiler_params=cparams,
        )(x_lc, s_lc, dist_lc,
          w1a[:D], w1a[D:2 * D], w1a[2 * D:],
          p["l1"]["b"].reshape(1, D), p["l2"]["w"].reshape(1, D),
          w1_mlp, b1_mlp, w2_mlp, b2_mlp)
        # attn-l2 bias: constant shift of the scores, does not change the softmax.
        scores = scores + p["l2"]["b"].reshape(1, 1, 1)
    else:
        p = params["attn"]
        dim = D // num_heads
        wq = _permute_head_cols(p["q"]["w"], num_heads, dim)
        bq = _permute_head_vec(p["q"]["b"], num_heads, dim).reshape(1, D)
        wk = _permute_head_cols(p["k"]["w"], num_heads, dim)
        wv = _permute_head_cols(p["v"]["w"], num_heads, dim)
        wkv = jnp.concatenate([wk, wv], axis=1)                      # (D, 2D)
        bkv = jnp.concatenate([_permute_head_vec(p["k"]["b"], num_heads, dim),
                               _permute_head_vec(p["v"]["b"], num_heads, dim)]
                              ).reshape(1, 2 * D)
        wm = _permute_head_rows(p["merge"]["w"], num_heads, dim)     # rows permuted
        bm = p["merge"]["b"].reshape(1, D)
        out, scores = pl.pallas_call(
            functools.partial(_self_fused_kernel, num_heads=num_heads, head_dim=dim),
            grid=(B,),
            out_shape=out_shapes,
            in_specs=[
                per_b((1, N, D)), per_b((1, M, D)),
                full2d((D, D)), full2d((1, D)),
                full2d((D, 2 * D)), full2d((1, 2 * D)),
                full2d((D, D)), full2d((1, D)),
                full2d((2 * D, 2 * D)), full2d((1, 2 * D)),
                full2d((2 * D, D)), full2d((1, D)),
            ],
            out_specs=out_specs,
            compiler_params=cparams,
        )(x_lc, s_lc, wq, bq, wkv, bkv, wm, bm,
          w1_mlp, b1_mlp, w2_mlp, b2_mlp)

    return jnp.transpose(out, (0, 2, 1)), scores


# ----------------------------------------------------------------------------
# Deterministic parameter init (shapes per the PyTorch __init__)
# ----------------------------------------------------------------------------
def _init_linear(key, cin, cout, zero_bias=False):
    kw, kb = jax.random.split(key)
    bound = 1.0 / math.sqrt(cin)
    w = jax.random.uniform(kw, (cin, cout), jnp.float32, -bound, bound)
    b = (jnp.zeros((cout,), jnp.float32) if zero_bias
         else jax.random.uniform(kb, (cout,), jnp.float32, -bound, bound))
    return {"w": w, "b": b}


def init_params(key, feature_dim, *, attn_type):
    keys = jax.random.split(key, 6)
    if attn_type == "cross":
        attn = {"l1": _init_linear(keys[0], 3 * feature_dim, feature_dim),
                "l2": _init_linear(keys[1], feature_dim, 1)}
    else:
        attn = {"q": _init_linear(keys[0], feature_dim, feature_dim),
                "k": _init_linear(keys[1], feature_dim, feature_dim),
                "v": _init_linear(keys[2], feature_dim, feature_dim),
                "merge": _init_linear(keys[3], feature_dim, feature_dim)}
    # self.mlp = MLP([2F, 2F, F]); last bias set to 0 (nn.init.constant_)
    mlp = {"l1": _init_linear(keys[4], 2 * feature_dim, 2 * feature_dim),
           "l2": _init_linear(keys[5], 2 * feature_dim, feature_dim, zero_bias=True)}
    return {"attn": attn, "mlp": mlp}


# ----------------------------------------------------------------------------
# Plain-jnp reference (no Pallas) for a correctness spot-check
# ----------------------------------------------------------------------------
def _ref_lin(x, w, b, relu=False):
    y = x @ w + b
    return jnp.maximum(y, 0.0) if relu else y


def _ref_forward(params, x, source, dist, attn_type, num_heads):
    outs, weights = [], []
    for bi in range(x.shape[0]):
        x_lc, s_lc = x[bi].T, source[bi].T
        n, d = x_lc.shape
        m = s_lc.shape[0]
        p = params["attn"]
        if attn_type == "cross":
            cat = jnp.concatenate([jnp.repeat(x_lc, m, axis=0),
                                   jnp.tile(s_lc, (n, 1)), dist[bi].T], axis=1)
            sc = _ref_lin(_ref_lin(cat, p["l1"]["w"], p["l1"]["b"], True),
                          p["l2"]["w"], p["l2"]["b"]).reshape(n, m)
            msg = jax.nn.softmax(sc, axis=-1) @ s_lc
            w = sc
        else:
            dim = d // num_heads
            q = _ref_lin(x_lc, p["q"]["w"], p["q"]["b"]).reshape(n, dim, num_heads).transpose(2, 0, 1)
            k = _ref_lin(s_lc, p["k"]["w"], p["k"]["b"]).reshape(m, dim, num_heads).transpose(2, 0, 1)
            v = _ref_lin(s_lc, p["v"]["w"], p["v"]["b"]).reshape(m, dim, num_heads).transpose(2, 0, 1)
            sc = jnp.einsum("hnd,hmd->hnm", q, k) / math.sqrt(dim)
            oh = jnp.einsum("hnm,hmd->hnd", jax.nn.softmax(sc, axis=-1), v)
            msg = _ref_lin(oh.transpose(1, 2, 0).reshape(n, d), p["merge"]["w"], p["merge"]["b"])
            w = sc.mean(axis=0)
        h = jnp.concatenate([x_lc, msg], axis=1)
        h = _ref_lin(h, params["mlp"]["l1"]["w"], params["mlp"]["l1"]["b"], True)
        outs.append(_ref_lin(h, params["mlp"]["l2"]["w"], params["mlp"]["l2"]["b"]).T)
        weights.append(w)
    return jnp.stack(outs), jnp.stack(weights)


# ----------------------------------------------------------------------------
if __name__ == "__main__":
    key = jax.random.PRNGKey(0)
    D, H = 32, 4          # feature_dim, num_heads
    B, N, M = 2, 8, 16    # batch, n_agent (query len), n_frontier (key len)

    k1, k2, k3, kp1, kp2 = jax.random.split(key, 5)
    x = jax.random.normal(k1, (B, D, N), jnp.float32)           # NCL
    source = jax.random.normal(k2, (B, D, M), jnp.float32)      # NCL
    dist = jax.random.normal(k3, (B, D, N * M), jnp.float32)    # NCL (cross path)

    params_self = init_params(kp1, D, attn_type="self")
    params_cross = init_params(kp2, D, attn_type="cross")

    self_fwd = jax.jit(functools.partial(attentional_propagation,
                                         attn_type="self", num_heads=H))
    cross_fwd = jax.jit(functools.partial(attentional_propagation,
                                          attn_type="cross"))

    # type='self' -> MultiHeadedAttention ; type='cross' -> MLPAttention
    out_s, w_s = self_fwd(params_self, x, source, None, None)
    out_c, w_c = cross_fwd(params_cross, x, source, dist, None)
    jax.block_until_ready((out_s, w_s, out_c, w_c))

    ref_out_s, ref_w_s = _ref_forward(params_self, x, source, None, "self", H)
    ref_out_c, ref_w_c = _ref_forward(params_cross, x, source, dist, "cross", H)
    # Outputs go through pl.reciprocal(approx=True) in the kernel softmax, so the
    # tolerance on them is slightly looser than on the (exact) score outputs.
    assert jnp.allclose(out_s, ref_out_s, atol=2e-2, rtol=2e-2)
    assert jnp.allclose(w_s, ref_w_s, atol=1e-3, rtol=1e-3)
    assert jnp.allclose(out_c, ref_out_c, atol=2e-2, rtol=2e-2)
    assert jnp.allclose(w_c, ref_w_c, atol=1e-3, rtol=1e-3)

    print("KERNEL_OK")
</pallas_src>

<mosaic_0001>
module attributes {stable_mosaic.version = 11 : i64} {
  func.func @_self_fused_kernel(%arg0: i32, %arg1: memref<1x8x32xf32, #tpu.memory_space<vmem>>, %arg2: memref<1x16x32xf32, #tpu.memory_space<vmem>>, %arg3: memref<32x32xf32, #tpu.memory_space<vmem>>, %arg4: memref<1x32xf32, #tpu.memory_space<vmem>>, %arg5: memref<32x64xf32, #tpu.memory_space<vmem>>, %arg6: memref<1x64xf32, #tpu.memory_space<vmem>>, %arg7: memref<32x32xf32, #tpu.memory_space<vmem>>, %arg8: memref<1x32xf32, #tpu.memory_space<vmem>>, %arg9: memref<64x64xf32, #tpu.memory_space<vmem>>, %arg10: memref<1x64xf32, #tpu.memory_space<vmem>>, %arg11: memref<64x32xf32, #tpu.memory_space<vmem>>, %arg12: memref<1x32xf32, #tpu.memory_space<vmem>>, %arg13: memref<1x8x32xf32, #tpu.memory_space<vmem>>, %arg14: memref<1x8x16xf32, #tpu.memory_space<vmem>>) attributes {dimension_semantics = [#tpu.dimension_semantics<parallel>], iteration_bounds = array<i64: 2>, scalar_prefetch = 0 : i64, scratch_operands = 0 : i64, tpu.core_type = #tpu.core_type<tc>, window_params = [{transform_indices = @transform_0, window_bounds = array<i64: 1, 8, 32>}, {transform_indices = @transform_1, window_bounds = array<i64: 1, 16, 32>}, {pipeline_mode = #tpu.pipeline_mode<synchronous>, transform_indices = @transform_2, window_bounds = array<i64: 32, 32>}, {pipeline_mode = #tpu.pipeline_mode<synchronous>, transform_indices = @transform_3, window_bounds = array<i64: 1, 32>}, {pipeline_mode = #tpu.pipeline_mode<synchronous>, transform_indices = @transform_4, window_bounds = array<i64: 32, 64>}, {pipeline_mode = #tpu.pipeline_mode<synchronous>, transform_indices = @transform_5, window_bounds = array<i64: 1, 64>}, {pipeline_mode = #tpu.pipeline_mode<synchronous>, transform_indices = @transform_6, window_bounds = array<i64: 32, 32>}, {pipeline_mode = #tpu.pipeline_mode<synchronous>, transform_indices = @transform_7, window_bounds = array<i64: 1, 32>}, {pipeline_mode = #tpu.pipeline_mode<synchronous>, transform_indices = @transform_8, window_bounds = array<i64: 64, 64>}, {pipeline_mode = #tpu.pipeline_mode<synchronous>, transform_indices = @transform_9, window_bounds = array<i64: 1, 64>}, {pipeline_mode = #tpu.pipeline_mode<synchronous>, transform_indices = @transform_10, window_bounds = array<i64: 64, 32>}, {pipeline_mode = #tpu.pipeline_mode<synchronous>, transform_indices = @transform_11, window_bounds = array<i64: 1, 32>}, {transform_indices = @transform_12, window_bounds = array<i64: 1, 8, 32>}, {transform_indices = @transform_13, window_bounds = array<i64: 1, 8, 16>}]} {
    %c0 = arith.constant 0 : index
    %c0_0 = arith.constant 0 : index
    %c0_1 = arith.constant 0 : index
    %0 = vector.load %arg1[%c0, %c0_0, %c0_1] : memref<1x8x32xf32, #tpu.memory_space<vmem>>, vector<1x8x32xf32>
    %1 = vector.shape_cast %0 : vector<1x8x32xf32> to vector<8x32xf32>
    %c0_2 = arith.constant 0 : index
    %c0_3 = arith.constant 0 : index
    %c0_4 = arith.constant 0 : index
    %2 = vector.load %arg2[%c0_2, %c0_3, %c0_4] : memref<1x16x32xf32, #tpu.memory_space<vmem>>, vector<1x16x32xf32>
    %3 = vector.shape_cast %2 : vector<1x16x32xf32> to vector<16x32xf32>
    %c0_5 = arith.constant 0 : index
    %c0_6 = arith.constant 0 : index
    %4 = vector.load %arg3[%c0_5, %c0_6] : memref<32x32xf32, #tpu.memory_space<vmem>>, vector<32x32xf32>
    %cst = arith.constant dense<0.000000e+00> : vector<8x32xf32>
    %5 = tpu.matmul %1, %4, %cst {dimension_numbers = #tpu.dot_dimension_numbers<[1], [0], [0], [1], [0, 0, 1, 1], [], []>} : vector<8x32xf32>, vector<32x32xf32>, vector<8x32xf32> -> vector<8x32xf32>
    %c0_7 = arith.constant 0 : index
    %c0_8 = arith.constant 0 : index
    %6 = vector.load %arg4[%c0_7, %c0_8] : memref<1x32xf32, #tpu.memory_space<vmem>>, vector<1x32xf32>
    %7 = vector.broadcast %6 : vector<1x32xf32> to vector<8x32xf32>
    %8 = arith.addf %5, %7 : vector<8x32xf32>
    %c0_9 = arith.constant 0 : index
    %c0_10 = arith.constant 0 : index
    %9 = vector.load %arg5[%c0_9, %c0_10] : memref<32x64xf32, #tpu.memory_space<vmem>>, vector<32x64xf32>
    %cst_11 = arith.constant dense<0.000000e+00> : vector<16x64xf32>
    %10 = tpu.matmul %3, %9, %cst_11 {dimension_numbers = #tpu.dot_dimension_numbers<[1], [0], [0], [1], [0, 0, 1, 1], [], []>} : vector<16x32xf32>, vector<32x64xf32>, vector<16x64xf32> -> vector<16x64xf32>
    %c0_12 = arith.constant 0 : index
    %c0_13 = arith.constant 0 : index
    %11 = vector.load %arg6[%c0_12, %c0_13] : memref<1x64xf32, #tpu.memory_space<vmem>>, vector<1x64xf32>
    %12 = vector.broadcast %11 : vector<1x64xf32> to vector<16x64xf32>
    %13 = arith.addf %10, %12 : vector<16x64xf32>
    %c0_14 = arith.constant 0 : index
    %c0_15 = arith.constant 0 : index
    %14 = vector.load %arg7[%c0_14, %c0_15] : memref<32x32xf32, #tpu.memory_space<vmem>>, vector<32x32xf32>
    %cst_16 = arith.constant 0.000000e+00 : f32
    %15 = vector.broadcast %cst_16 : f32 to vector<8x32xf32>
    %cst_17 = arith.constant 0.000000e+00 : f32
    %16 = vector.broadcast %cst_17 : f32 to vector<8x16xf32>
    %17 = vector.extract_strided_slice %8 {offsets = [0, 0], sizes = [8, 8], strides = [1, 1]} : vector<8x32xf32> to vector<8x8xf32>
    %18 = vector.extract_strided_slice %13 {offsets = [0, 0], sizes = [16, 8], strides = [1, 1]} : vector<16x64xf32> to vector<16x8xf32>
    %19 = vector.extract_strided_slice %13 {offsets = [0, 32], sizes = [16, 8], strides = [1, 1]} : vector<16x64xf32> to vector<16x8xf32>
    %cst_18 = arith.constant dense<0.000000e+00> : vector<8x16xf32>
    %20 = tpu.matmul %17, %18, %cst_18 {dimension_numbers = #tpu.dot_dimension_numbers<[1], [1], [0], [0], [0, 0, 1, 0], [], []>} : vector<8x8xf32>, vector<16x8xf32>, vector<8x16xf32> -> vector<8x16xf32>
    %cst_19 = arith.constant 0.353553385 : f32
    %21 = vector.broadcast %cst_19 : f32 to vector<8x16xf32>
    %22 = arith.mulf %20, %21 : vector<8x16xf32>
    %23 = arith.addf %16, %22 : vector<8x16xf32>
    %cst_20 = arith.constant dense<0xFF800000> : vector<8xf32>
    %24 = vector.multi_reduction <maximumf>, %22, %cst_20 [1] : vector<8x16xf32> to vector<8xf32>
    %25 = vector.shape_cast %24 : vector<8xf32> to vector<8x1xf32>
    %26 = vector.broadcast %25 : vector<8x1xf32> to vector<8x16xf32>
    %27 = arith.subf %22, %26 : vector<8x16xf32>
    %28 = math.exp %27 : vector<8x16xf32>
    %cst_21 = arith.constant dense<0.000000e+00> : vector<8xf32>
    %29 = vector.multi_reduction <add>, %28, %cst_21 [1] : vector<8x16xf32> to vector<8xf32>
    %30 = vector.shape_cast %29 : vector<8xf32> to vector<8x1xf32>
    %31 = tpu.reciprocal %30 {approx = true} : vector<8x1xf32> -> vector<8x1xf32>
    %32 = vector.broadcast %31 : vector<8x1xf32> to vector<8x16xf32>
    %33 = arith.mulf %28, %32 : vector<8x16xf32>
    %cst_22 = arith.constant dense<0.000000e+00> : vector<8x8xf32>
    %34 = tpu.matmul %33, %19, %cst_22 {dimension_numbers = #tpu.dot_dimension_numbers<[1], [0], [0], [1], [0, 0, 1, 1], [], []>} : vector<8x16xf32>, vector<16x8xf32>, vector<8x8xf32> -> vector<8x8xf32>
    %35 = vector.extract_strided_slice %14 {offsets = [0, 0], sizes = [8, 32], strides = [1, 1]} : vector<32x32xf32> to vector<8x32xf32>
    %cst_23 = arith.constant dense<0.000000e+00> : vector<8x32xf32>
    %36 = tpu.matmul %34, %35, %cst_23 {dimension_numbers = #tpu.dot_dimension_numbers<[1], [0], [0], [1], [0, 0, 1, 1], [], []>} : vector<8x8xf32>, vector<8x32xf32>, vector<8x32xf32> -> vector<8x32xf32>
    %37 = arith.addf %15, %36 : vector<8x32xf32>
    %38 = vector.extract_strided_slice %8 {offsets = [0, 8], sizes = [8, 8], strides = [1, 1]} : vector<8x32xf32> to vector<8x8xf32>
    %39 = vector.extract_strided_slice %13 {offsets = [0, 8], sizes = [16, 8], strides = [1, 1]} : vector<16x64xf32> to vector<16x8xf32>
    %40 = vector.extract_strided_slice %13 {offsets = [0, 40], sizes = [16, 8], strides = [1, 1]} : vector<16x64xf32> to vector<16x8xf32>
    %cst_24 = arith.constant dense<0.000000e+00> : vector<8x16xf32>
    %41 = tpu.matmul %38, %39, %cst_24 {dimension_numbers = #tpu.dot_dimension_numbers<[1], [1], [0], [0], [0, 0, 1, 0], [], []>} : vector<8x8xf32>, vector<16x8xf32>, vector<8x16xf32> -> vector<8x16xf32>
    %cst_25 = arith.constant 0.353553385 : f32
    %42 = vector.broadcast %cst_25 : f32 to vector<8x16xf32>
    %43 = arith.mulf %41, %42 : vector<8x16xf32>
    %44 = arith.addf %23, %43 : vector<8x16xf32>
    %cst_26 = arith.constant dense<0xFF800000> : vector<8xf32>
    %45 = vector.multi_reduction <maximumf>, %43, %cst_26 [1] : vector<8x16xf32> to vector<8xf32>
    %46 = vector.shape_cast %45 : vector<8xf32> to vector<8x1xf32>
    %47 = vector.broadcast %46 : vector<8x1xf32> to vector<8x16xf32>
    %48 = arith.subf %43, %47 : vector<8x16xf32>
    %49 = math.exp %48 : vector<8x16xf32>
    %cst_27 = arith.constant dense<0.000000e+00> : vector<8xf32>
    %50 = vector.multi_reduction <add>, %49, %cst_27 [1] : vector<8x16xf32> to vector<8xf32>
    %51 = vector.shape_cast %50 : vector<8xf32> to vector<8x1xf32>
    %52 = tpu.reciprocal %51 {approx = true} : vector<8x1xf32> -> vector<8x1xf32>
    %53 = vector.broadcast %52 : vector<8x1xf32> to vector<8x16xf32>
    %54 = arith.mulf %49, %53 : vector<8x16xf32>
    %cst_28 = arith.constant dense<0.000000e+00> : vector<8x8xf32>
    %55 = tpu.matmul %54, %40, %cst_28 {dimension_numbers = #tpu.dot_dimension_numbers<[1], [0], [0], [1], [0, 0, 1, 1], [], []>} : vector<8x16xf32>, vector<16x8xf32>, vector<8x8xf32> -> vector<8x8xf32>
    %56 = vector.extract_strided_slice %14 {offsets = [8, 0], sizes = [8, 32], strides = [1, 1]} : vector<32x32xf32> to vector<8x32xf32>
    %cst_29 = arith.constant dense<0.000000e+00> : vector<8x32xf32>
    %57 = tpu.matmul %55, %56, %cst_29 {dimension_numbers = #tpu.dot_dimension_numbers<[1], [0], [0], [1], [0, 0, 1, 1], [], []>} : vector<8x8xf32>, vector<8x32xf32>, vector<8x32xf32> -> vector<8x32xf32>
    %58 = arith.addf %37, %57 : vector<8x32xf32>
    %59 = vector.extract_strided_slice %8 {offsets = [0, 16], sizes = [8, 8], strides = [1, 1]} : vector<8x32xf32> to vector<8x8xf32>
    %60 = vector.extract_strided_slice %13 {offsets = [0, 16], sizes = [16, 8], strides = [1, 1]} : vector<16x64xf32> to vector<16x8xf32>
    %61 = vector.extract_strided_slice %13 {offsets = [0, 48], sizes = [16, 8], strides = [1, 1]} : vector<16x64xf32> to vector<16x8xf32>
    %cst_30 = arith.constant dense<0.000000e+00> : vector<8x16xf32>
    %62 = tpu.matmul %59, %60, %cst_30 {dimension_numbers = #tpu.dot_dimension_numbers<[1], [1], [0], [0], [0, 0, 1, 0], [], []>} : vector<8x8xf32>, vector<16x8xf32>, vector<8x16xf32> -> vector<8x16xf32>
    %cst_31 = arith.constant 0.353553385 : f32
    %63 = vector.broadcast %cst_31 : f32 to vector<8x16xf32>
    %64 = arith.mulf %62, %63 : vector<8x16xf32>
    %65 = arith.addf %44, %64 : vector<8x16xf32>
    %cst_32 = arith.constant dense<0xFF800000> : vector<8xf32>
    %66 = vector.multi_reduction <maximumf>, %64, %cst_32 [1] : vector<8x16xf32> to vector<8xf32>
    %67 = vector.shape_cast %66 : vector<8xf32> to vector<8x1xf32>
    %68 = vector.broadcast %67 : vector<8x1xf32> to vector<8x16xf32>
    %69 = arith.subf %64, %68 : vector<8x16xf32>
    %70 = math.exp %69 : vector<8x16xf32>
    %cst_33 = arith.constant dense<0.000000e+00> : vector<8xf32>
    %71 = vector.multi_reduction <add>, %70, %cst_33 [1] : vector<8x16xf32> to vector<8xf32>
    %72 = vector.shape_cast %71 : vector<8xf32> to vector<8x1xf32>
    %73 = tpu.reciprocal %72 {approx = true} : vector<8x1xf32> -> vector<8x1xf32>
    %74 = vector.broadcast %73 : vector<8x1xf32> to vector<8x16xf32>
    %75 = arith.mulf %70, %74 : vector<8x16xf32>
    %cst_34 = arith.constant dense<0.000000e+00> : vector<8x8xf32>
    %76 = tpu.matmul %75, %61, %cst_34 {dimension_numbers = #tpu.dot_dimension_numbers<[1], [0], [0], [1], [0, 0, 1, 1], [], []>} : vector<8x16xf32>, vector<16x8xf32>, vector<8x8xf32> -> vector<8x8xf32>
    %77 = vector.extract_strided_slice %14 {offsets = [16, 0], sizes = [8, 32], strides = [1, 1]} : vector<32x32xf32> to vector<8x32xf32>
    %cst_35 = arith.constant dense<0.000000e+00> : vector<8x32xf32>
    %78 = tpu.matmul %76, %77, %cst_35 {dimension_numbers = #tpu.dot_dimension_numbers<[1], [0], [0], [1], [0, 0, 1, 1], [], []>} : vector<8x8xf32>, vector<8x32xf32>, vector<8x32xf32> -> vector<8x32xf32>
    %79 = arith.addf %58, %78 : vector<8x32xf32>
    %80 = vector.extract_strided_slice %8 {offsets = [0, 24], sizes = [8, 8], strides = [1, 1]} : vector<8x32xf32> to vector<8x8xf32>
    %81 = vector.extract_strided_slice %13 {offsets = [0, 24], sizes = [16, 8], strides = [1, 1]} : vector<16x64xf32> to vector<16x8xf32>
    %82 = vector.extract_strided_slice %13 {offsets = [0, 56], sizes = [16, 8], strides = [1, 1]} : vector<16x64xf32> to vector<16x8xf32>
    %cst_36 = arith.constant dense<0.000000e+00> : vector<8x16xf32>
    %83 = tpu.matmul %80, %81, %cst_36 {dimension_numbers = #tpu.dot_dimension_numbers<[1], [1], [0], [0], [0, 0, 1, 0], [], []>} : vector<8x8xf32>, vector<16x8xf32>, vector<8x16xf32> -> vector<8x16xf32>
    %cst_37 = arith.constant 0.353553385 : f32
    %84 = vector.broadcast %cst_37 : f32 to vector<8x16xf32>
    %85 = arith.mulf %83, %84 : vector<8x16xf32>
    %86 = arith.addf %65, %85 : vector<8x16xf32>
    %cst_38 = arith.constant dense<0xFF800000> : vector<8xf32>
    %87 = vector.multi_reduction <maximumf>, %85, %cst_38 [1] : vector<8x16xf32> to vector<8xf32>
    %88 = vector.shape_cast %87 : vector<8xf32> to vector<8x1xf32>
    %89 = vector.broadcast %88 : vector<8x1xf32> to vector<8x16xf32>
    %90 = arith.subf %85, %89 : vector<8x16xf32>
    %91 = math.exp %90 : vector<8x16xf32>
    %cst_39 = arith.constant dense<0.000000e+00> : vector<8xf32>
    %92 = vector.multi_reduction <add>, %91, %cst_39 [1] : vector<8x16xf32> to vector<8xf32>
    %93 = vector.shape_cast %92 : vector<8xf32> to vector<8x1xf32>
    %94 = tpu.reciprocal %93 {approx = true} : vector<8x1xf32> -> vector<8x1xf32>
    %95 = vector.broadcast %94 : vector<8x1xf32> to vector<8x16xf32>
    %96 = arith.mulf %91, %95 : vector<8x16xf32>
    %cst_40 = arith.constant dense<0.000000e+00> : vector<8x8xf32>
    %97 = tpu.matmul %96, %82, %cst_40 {dimension_numbers = #tpu.dot_dimension_numbers<[1], [0], [0], [1], [0, 0, 1, 1], [], []>} : vector<8x16xf32>, vector<16x8xf32>, vector<8x8xf32> -> vector<8x8xf32>
    %98 = vector.extract_strided_slice %14 {offsets = [24, 0], sizes = [8, 32], strides = [1, 1]} : vector<32x32xf32> to vector<8x32xf32>
    %cst_41 = arith.constant dense<0.000000e+00> : vector<8x32xf32>
    %99 = tpu.matmul %97, %98, %cst_41 {dimension_numbers = #tpu.dot_dimension_numbers<[1], [0], [0], [1], [0, 0, 1, 1], [], []>} : vector<8x8xf32>, vector<8x32xf32>, vector<8x32xf32> -> vector<8x32xf32>
    %100 = arith.addf %79, %99 : vector<8x32xf32>
    %c0_42 = arith.constant 0 : index
    %c0_43 = arith.constant 0 : index
    %101 = vector.load %arg8[%c0_42, %c0_43] : memref<1x32xf32, #tpu.memory_space<vmem>>, vector<1x32xf32>
    %102 = vector.broadcast %101 : vector<1x32xf32> to vector<8x32xf32>
    %103 = arith.addf %100, %102 : vector<8x32xf32>
    %c0_44 = arith.constant 0 : index
    %c0_45 = arith.constant 0 : index
    %104 = vector.load %arg9[%c0_44, %c0_45] : memref<64x64xf32, #tpu.memory_space<vmem>>, vector<64x64xf32>
    %105 = vector.extract_strided_slice %104 {offsets = [0, 0], sizes = [32, 64], strides = [1, 1]} : vector<64x64xf32> to vector<32x64xf32>
    %cst_46 = arith.constant dense<0.000000e+00> : vector<8x64xf32>
    %106 = tpu.matmul %1, %105, %cst_46 {dimension_numbers = #tpu.dot_dimension_numbers<[1], [0], [0], [1], [0, 0, 1, 1], [], []>} : vector<8x32xf32>, vector<32x64xf32>, vector<8x64xf32> -> vector<8x64xf32>
    %107 = vector.extract_strided_slice %104 {offsets = [32, 0], sizes = [32, 64], strides = [1, 1]} : vector<64x64xf32> to vector<32x64xf32>
    %cst_47 = arith.constant dense<0.000000e+00> : vector<8x64xf32>
    %108 = tpu.matmul %103, %107, %cst_47 {dimension_numbers = #tpu.dot_dimension_numbers<[1], [0], [0], [1], [0, 0, 1, 1], [], []>} : vector<8x32xf32>, vector<32x64xf32>, vector<8x64xf32> -> vector<8x64xf32>
    %109 = arith.addf %106, %108 : vector<8x64xf32>
    %c0_48 = arith.constant 0 : index
    %c0_49 = arith.constant 0 : index
    %110 = vector.load %arg10[%c0_48, %c0_49] : memref<1x64xf32, #tpu.memory_space<vmem>>, vector<1x64xf32>
    %111 = vector.broadcast %110 : vector<1x64xf32> to vector<8x64xf32>
    %112 = arith.addf %109, %111 : vector<8x64xf32>
    %cst_50 = arith.constant 0.000000e+00 : f32
    %113 = vector.broadcast %cst_50 : f32 to vector<8x64xf32>
    %114 = arith.maximumf %112, %113 : vector<8x64xf32>
    %c0_51 = arith.constant 0 : index
    %c0_52 = arith.constant 0 : index
    %115 = vector.load %arg11[%c0_51, %c0_52] : memref<64x32xf32, #tpu.memory_space<vmem>>, vector<64x32xf32>
    %cst_53 = arith.constant dense<0.000000e+00> : vector<8x32xf32>
    %116 = tpu.matmul %114, %115, %cst_53 {dimension_numbers = #tpu.dot_dimension_numbers<[1], [0], [0], [1], [0, 0, 1, 1], [], []>} : vector<8x64xf32>, vector<64x32xf32>, vector<8x32xf32> -> vector<8x32xf32>
    %c0_54 = arith.constant 0 : index
    %c0_55 = arith.constant 0 : index
    %117 = vector.load %arg12[%c0_54, %c0_55] : memref<1x32xf32, #tpu.memory_space<vmem>>, vector<1x32xf32>
    %118 = vector.broadcast %117 : vector<1x32xf32> to vector<8x32xf32>
    %119 = arith.addf %116, %118 : vector<8x32xf32>
    %c0_56 = arith.constant 0 : index
    %c0_57 = arith.constant 0 : index
    %c0_58 = arith.constant 0 : index
    %120 = vector.load %arg13[%c0_56, %c0_57, %c0_58] : memref<1x8x32xf32, #tpu.memory_space<vmem>>, vector<1x8x32xf32>
    %121 = vector.shape_cast %120 : vector<1x8x32xf32> to vector<8x32xf32>
    %122 = vector.shape_cast %119 : vector<8x32xf32> to vector<1x8x32xf32>
    tpu.vector_store %arg13[%c0_56, %c0_57, %c0_58], %122 {strides = array<i32>} : memref<1x8x32xf32, #tpu.memory_space<vmem>>, vector<1x8x32xf32>,
    %cst_59 = arith.constant 2.500000e-01 : f32
    %123 = vector.broadcast %cst_59 : f32 to vector<8x16xf32>
    %124 = arith.mulf %86, %123 : vector<8x16xf32>
    %c0_60 = arith.constant 0 : index
    %c0_61 = arith.constant 0 : index
    %c0_62 = arith.constant 0 : index
    %125 = vector.load %arg14[%c0_60, %c0_61, %c0_62] : memref<1x8x16xf32, #tpu.memory_space<vmem>>, vector<1x8x16xf32>
    %126 = vector.shape_cast %125 : vector<1x8x16xf32> to vector<8x16xf32>
    %127 = vector.shape_cast %124 : vector<8x16xf32> to vector<1x8x16xf32>
    tpu.vector_store %arg14[%c0_60, %c0_61, %c0_62], %127 {strides = array<i32>} : memref<1x8x16xf32, #tpu.memory_space<vmem>>, vector<1x8x16xf32>,
    return
  }
  func.func @transform_0(%arg0: i32) -> (i32, i32, i32) {
    %c0_i32 = arith.constant 0 : i32
    %c0_i32_0 = arith.constant 0 : i32
    %c0_i32_1 = arith.constant 0 : i32
    return %arg0, %c0_i32, %c0_i32_0 : i32, i32, i32
  }
  func.func @transform_1(%arg0: i32) -> (i32, i32, i32) {
    %c0_i32 = arith.constant 0 : i32
    %c0_i32_0 = arith.constant 0 : i32
    %c0_i32_1 = arith.constant 0 : i32
    return %arg0, %c0_i32, %c0_i32_0 : i32, i32, i32
  }
  func.func @transform_2(%arg0: i32) -> (i32, i32) {
    %c0_i32 = arith.constant 0 : i32
    %c0_i32_0 = arith.constant 0 : i32
    %c0_i32_1 = arith.constant 0 : i32
    return %c0_i32, %c0_i32_0 : i32, i32
  }
  func.func @transform_3(%arg0: i32) -> (i32, i32) {
    %c0_i32 = arith.constant 0 : i32
    %c0_i32_0 = arith.constant 0 : i32
    %c0_i32_1 = arith.constant 0 : i32
    return %c0_i32, %c0_i32_0 : i32, i32
  }
  func.func @transform_4(%arg0: i32) -> (i32, i32) {
    %c0_i32 = arith.constant 0 : i32
    %c0_i32_0 = arith.constant 0 : i32
    %c0_i32_1 = arith.constant 0 : i32
    return %c0_i32, %c0_i32_0 : i32, i32
  }
  func.func @transform_5(%arg0: i32) -> (i32, i32) {
    %c0_i32 = arith.constant 0 : i32
    %c0_i32_0 = arith.constant 0 : i32
    %c0_i32_1 = arith.constant 0 : i32
    return %c0_i32, %c0_i32_0 : i32, i32
  }
  func.func @transform_6(%arg0: i32) -> (i32, i32) {
    %c0_i32 = arith.constant 0 : i32
    %c0_i32_0 = arith.constant 0 : i32
    %c0_i32_1 = arith.constant 0 : i32
    return %c0_i32, %c0_i32_0 : i32, i32
  }
  func.func @transform_7(%arg0: i32) -> (i32, i32) {
    %c0_i32 = arith.constant 0 : i32
    %c0_i32_0 = arith.constant 0 : i32
    %c0_i32_1 = arith.constant 0 : i32
    return %c0_i32, %c0_i32_0 : i32, i32
  }
  func.func @transform_8(%arg0: i32) -> (i32, i32) {
    %c0_i32 = arith.constant 0 : i32
    %c0_i32_0 = arith.constant 0 : i32
    %c0_i32_1 = arith.constant 0 : i32
    return %c0_i32, %c0_i32_0 : i32, i32
  }
  func.func @transform_9(%arg0: i32) -> (i32, i32) {
    %c0_i32 = arith.constant 0 : i32
    %c0_i32_0 = arith.constant 0 : i32
    %c0_i32_1 = arith.constant 0 : i32
    return %c0_i32, %c0_i32_0 : i32, i32
  }
  func.func @transform_10(%arg0: i32) -> (i32, i32) {
    %c0_i32 = arith.constant 0 : i32
    %c0_i32_0 = arith.constant 0 : i32
    %c0_i32_1 = arith.constant 0 : i32
    return %c0_i32, %c0_i32_0 : i32, i32
  }
  func.func @transform_11(%arg0: i32) -> (i32, i32) {
    %c0_i32 = arith.constant 0 : i32
    %c0_i32_0 = arith.constant 0 : i32
    %c0_i32_1 = arith.constant 0 : i32
    return %c0_i32, %c0_i32_0 : i32, i32
  }
  func.func @transform_12(%arg0: i32) -> (i32, i32, i32) {
    %c0_i32 = arith.constant 0 : i32
    %c0_i32_0 = arith.constant 0 : i32
    %c0_i32_1 = arith.constant 0 : i32
    return %arg0, %c0_i32, %c0_i32_0 : i32, i32, i32
  }
  func.func @transform_13(%arg0: i32) -> (i32, i32, i32) {
    %c0_i32 = arith.constant 0 : i32
    %c0_i32_0 = arith.constant 0 : i32
    %c0_i32_1 = arith.constant 0 : i32
    return %arg0, %c0_i32, %c0_i32_0 : i32, i32, i32
  }
}

</mosaic_0001>

<llo_original>
// kernel: attentional_propagation.1
$region0: #{attentional_propagation.1}
  #allocation0 [shape = 'u32[]', space=smem, size = 0x4, offset = 0x4, fixed_abs, tag = 'smem constant byte address 0x4 - core index']
  #allocation1 [shape = 'u32[144,128]{1,0:T(1,128)}', space=vmem, size = 0x12000, scoped, tag = 'internal scratch']
  %s0 = inlined_call_operand.vmem [shape: f32[2,8,32], index: 0, kind: input, shape index: {}]
  %s1 = inlined_call_operand.vmem [shape: f32[2,16,32], index: 1, kind: input, shape index: {}]
  %s2 = inlined_call_operand.vmem [shape: f32[32,32], index: 2, kind: input, shape index: {}]
  %s3 = inlined_call_operand.vmem [shape: f32[1,32], index: 3, kind: input, shape index: {}]
  %s4 = inlined_call_operand.vmem [shape: f32[32,64], index: 4, kind: input, shape index: {}]
  %s5 = inlined_call_operand.vmem [shape: f32[1,64], index: 5, kind: input, shape index: {}]
  %s6 = inlined_call_operand.vmem [shape: f32[32,32], index: 6, kind: input, shape index: {}]
  %s7 = inlined_call_operand.vmem [shape: f32[1,32], index: 7, kind: input, shape index: {}]
  %s8 = inlined_call_operand.vmem [shape: f32[64,64], index: 8, kind: input, shape index: {}]
  %s9 = inlined_call_operand.vmem [shape: f32[1,64], index: 9, kind: input, shape index: {}]
  %s10 = inlined_call_operand.vmem [shape: f32[64,32], index: 10, kind: input, shape index: {}]
  %s11 = inlined_call_operand.vmem [shape: f32[1,32], index: 11, kind: input, shape index: {}]
  %s12 = inlined_call_operand.hbm [shape: f32[2,8,32], index: 12, kind: output, shape index: {0}]
  %s13 = inlined_call_operand.hbm [shape: f32[2,8,16], index: 13, kind: output, shape index: {1}]
  %14 = xla_tuple %s12, %s13
  %s15 = sld [smem:[#allocation0]]
  $region89: #{attentional_propagation.1} parent=0
    _
  %s17 = ssub.s32 1, %s15
  %s18 = scalar_select 0, %s17, %s15
  $region1: #{attentional_propagation.1} parent=0
    #allocation2 [shape = 'u8[8192]{0}', space=vmem, size = 0x2000, scoped, tag = 'output window, operand 0']
    #allocation3 [shape = 's32[2]{0}', space=sflag, size = 0x8, scoped, tag = 'scoped memory for attentional_propagation.1']
    #allocation4 [shape = 'u8[8192]{0}', space=vmem, size = 0x2000, scoped, tag = 'output window, operand 1']
    #allocation5 [shape = 's32[2]{0}', space=sflag, size = 0x8, scoped, tag = 'scoped memory for attentional_propagation.1']
    %19 = vsyncpa [#allocation3], 0
    %s20 = scalar_lea.sflag [#allocation3], 1
    %21 = vsyncpa %s20, 0
    %22 = vsyncpa [#allocation5], 0
    %s23 = scalar_lea.sflag [#allocation5], 1
    %24 = vsyncpa %s23, 0
    loop: start=0, step=1, limit=4
    $region2: #{attentional_propagation.1} parent=1 // loop_pre_header
      _
    $region3: #{attentional_propagation.1} parent=1 // loop_header
      %s26 = sphi 0, %s30
      %p27 = scmp.ge.s32.totalorder %s26, 4
      %s36 = sphi 0, %s38
      %s39 = sphi 0, %s36
      %s40 = sphi 0, %s39
      %s56 = sphi 0, %s40
      %s62 = sphi 0, %s64
      %s65 = sphi 0, %s62
      %s66 = sphi 0, %s65
      %s82 = sphi 0, %s66
      %s86 = sphi 0, %s86
      %s88 = sphi 0, %s86
      %s89 = sphi 0, %s88
      %s103 = sphi 0, %s89
      %s107 = sphi 0, %s107
      %s109 = sphi 0, %s107
      %s110 = sphi 0, %s109
      %s124 = sphi 0, %s110
      %s128 = sphi 0, %s128
      %s130 = sphi 0, %s128
      %s131 = sphi 0, %s130
      %s145 = sphi 0, %s131
      %s149 = sphi 0, %s149
      %s151 = sphi 0, %s149
      %s152 = sphi 0, %s151
      %s166 = sphi 0, %s152
      %s170 = sphi 0, %s170
      %s172 = sphi 0, %s170
      %s173 = sphi 0, %s172
      %s187 = sphi 0, %s173
      %s191 = sphi 0, %s191
      %s193 = sphi 0, %s191
      %s194 = sphi 0, %s193
      %s208 = sphi 0, %s194
      %s212 = sphi 0, %s212
      %s214 = sphi 0, %s212
      %s215 = sphi 0, %s214
      %s229 = sphi 0, %s215
      %s233 = sphi 0, %s233
      %s235 = sphi 0, %s233
      %s236 = sphi 0, %s235
      %s250 = sphi 0, %s236
      %s254 = sphi 0, %s254
      %s256 = sphi 0, %s254
      %s257 = sphi 0, %s256
      %s271 = sphi 0, %s257
      %s275 = sphi 0, %s275
      %s277 = sphi 0, %s275
      %s278 = sphi 0, %s277
      %s292 = sphi 0, %s278
      %s298 = sphi 0, %s300
      %s301 = sphi 0, %s298
      %s302 = sphi 0, %s301
      %s318 = sphi 0, %s302
      %s324 = sphi 0, %s326
      %s327 = sphi 0, %s324
      %s328 = sphi 0, %s327
      %s344 = sphi 0, %s328
    $region4: #{attentional_propagation.1} parent=1 // loop_header_branch
      %29 = sbr.rel (%p27) target = $region8
    $region5: #{attentional_propagation.1} parent=1 // loop_body
      %s31 = ssub.s32 %s26, 1
      %s32 = ssub.s32 %s26, 2
      %s33 = sadd.s32 %s26, 1
      %s34 = ssub.s32 %s26, %s33
      %p35 = scmp.eq.s32.totalorder %s34, 0
      %s37 = sadd.s32 %s36, 1
      %s38 = scalar_select %p35, %s36, %s37
      %p41 = pneg %p35
      %p42 = scmp.eq.s32.totalorder %s26, 1
      %p43 = por %p41, %p42
      %p44 = scmp.ne.s32.totalorder %s36, %s39
      %p45 = scmp.eq.s32.totalorder %s26, 0
      %p46 = por %p44, %p45
      %p47 = scmp.ne.s32.totalorder %s36, %s39
      %p48 = scmp.eq.s32.totalorder %s31, 1
      %p49 = por %p47, %p48
      %p50 = scmp.ne.s32.totalorder %s39, %s40
      %p51 = scmp.eq.s32.totalorder %s31, 0
      %p52 = por %p50, %p51
      %p53 = scmp.ne.s32.totalorder %s39, %s40
      %p54 = scmp.eq.s32.totalorder %s32, 1
      %p55 = por %p53, %p54
      %p57 = scmp.ne.s32.totalorder %s40, %s56
      %p58 = scmp.eq.s32.totalorder %s32, 0
      %p59 = por %p57, %p58
      %s60 = ssub.s32 %s26, %s33
      %p61 = scmp.eq.s32.totalorder %s60, 0
      %s63 = sadd.s32 %s62, 1
      %s64 = scalar_select %p61, %s62, %s63
      %p67 = pneg %p61
      %p68 = scmp.eq.s32.totalorder %s26, 1
      %p69 = por %p67, %p68
      %p70 = scmp.ne.s32.totalorder %s62, %s65
      %p71 = scmp.eq.s32.totalorder %s26, 0
      %p72 = por %p70, %p71
      %p73 = scmp.ne.s32.totalorder %s62, %s65
      %p74 = scmp.eq.s32.totalorder %s31, 1
      %p75 = por %p73, %p74
      %p76 = scmp.ne.s32.totalorder %s65, %s66
      %p77 = scmp.eq.s32.totalorder %s31, 0
      %p78 = por %p76, %p77
      %p79 = scmp.ne.s32.totalorder %s65, %s66
      %p80 = scmp.eq.s32.totalorder %s32, 1
      %p81 = por %p79, %p80
      %p83 = scmp.ne.s32.totalorder %s66, %s82
      %p84 = scmp.eq.s32.totalorder %s32, 0
      %p85 = por %p83, %p84
      %s87 = sadd.s32 %s86, 1
      %p90 = scmp.eq.s32.totalorder %s26, 1
      %p91 = scmp.ne.s32.totalorder %s86, %s88
      %p92 = scmp.eq.s32.totalorder %s26, 0
      %p93 = por %p91, %p92
      %p94 = scmp.ne.s32.totalorder %s86, %s88
      %p95 = scmp.eq.s32.totalorder %s31, 1
      %p96 = por %p94, %p95
      %p97 = scmp.ne.s32.totalorder %s88, %s89
      %p98 = scmp.eq.s32.totalorder %s31, 0
      %p99 = por %p97, %p98
      %p100 = scmp.ne.s32.totalorder %s88, %s89
      %p101 = scmp.eq.s32.totalorder %s32, 1
      %p102 = por %p100, %p101
      %p104 = scmp.ne.s32.totalorder %s89, %s103
      %p105 = scmp.eq.s32.totalorder %s32, 0
      %p106 = por %p104, %p105
      %s108 = sadd.s32 %s107, 1
      %p111 = scmp.eq.s32.totalorder %s26, 1
      %p112 = scmp.ne.s32.totalorder %s107, %s109
      %p113 = scmp.eq.s32.totalorder %s26, 0
      %p114 = por %p112, %p113
      %p115 = scmp.ne.s32.totalorder %s107, %s109
      %p116 = scmp.eq.s32.totalorder %s31, 1
      %p117 = por %p115, %p116
      %p118 = scmp.ne.s32.totalorder %s109, %s110
      %p119 = scmp.eq.s32.totalorder %s31, 0
      %p120 = por %p118, %p119
      %p121 = scmp.ne.s32.totalorder %s109, %s110
      %p122 = scmp.eq.s32.totalorder %s32, 1
      %p123 = por %p121, %p122
      %p125 = scmp.ne.s32.totalorder %s110, %s124
      %p126 = scmp.eq.s32.totalorder %s32, 0
      %p127 = por %p125, %p126
      %s129 = sadd.s32 %s128, 1
      %p132 = scmp.eq.s32.totalorder %s26, 1
      %p133 = scmp.ne.s32.totalorder %s128, %s130
      %p134 = scmp.eq.s32.totalorder %s26, 0
      %p135 = por %p133, %p134
      %p136 = scmp.ne.s32.totalorder %s128, %s130
      %p137 = scmp.eq.s32.totalorder %s31, 1
      %p138 = por %p136, %p137
      %p139 = scmp.ne.s32.totalorder %s130, %s131
      %p140 = scmp.eq.s32.totalorder %s31, 0
      %p141 = por %p139, %p140
      %p142 = scmp.ne.s32.totalorder %s130, %s131
      %p143 = scmp.eq.s32.totalorder %s32, 1
      %p144 = por %p142, %p143
      %p146 = scmp.ne.s32.totalorder %s131, %s145
      %p147 = scmp.eq.s32.totalorder %s32, 0
      %p148 = por %p146, %p147
      %s150 = sadd.s32 %s149, 1
      %p153 = scmp.eq.s32.totalorder %s26, 1
      %p154 = scmp.ne.s32.totalorder %s149, %s151
      %p155 = scmp.eq.s32.totalorder %s26, 0
      %p156 = por %p154, %p155
      %p157 = scmp.ne.s32.totalorder %s149, %s151
      %p158 = scmp.eq.s32.totalorder %s31, 1
      %p159 = por %p157, %p158
      %p160 = scmp.ne.s32.totalorder %s151, %s152
      %p161 = scmp.eq.s32.totalorder %s31, 0
      %p162 = por %p160, %p161
      %p163 = scmp.ne.s32.totalorder %s151, %s152
      %p164 = scmp.eq.s32.totalorder %s32, 1
      %p165 = por %p163, %p164
      %p167 = scmp.ne.s32.totalorder %s152, %s166
      %p168 = scmp.eq.s32.totalorder %s32, 0
      %p169 = por %p167, %p168
      %s171 = sadd.s32 %s170, 1
      %p174 = scmp.eq.s32.totalorder %s26, 1
      %p175 = scmp.ne.s32.totalorder %s170, %s172
      %p176 = scmp.eq.s32.totalorder %s26, 0
      %p177 = por %p175, %p176
      %p178 = scmp.ne.s32.totalorder %s170, %s172
      %p179 = scmp.eq.s32.totalorder %s31, 1
      %p180 = por %p178, %p179
      %p181 = scmp.ne.s32.totalorder %s172, %s173
      %p182 = scmp.eq.s32.totalorder %s31, 0
      %p183 = por %p181, %p182
      %p184 = scmp.ne.s32.totalorder %s172, %s173
      %p185 = scmp.eq.s32.totalorder %s32, 1
      %p186 = por %p184, %p185
      %p188 = scmp.ne.s32.totalorder %s173, %s187
      %p189 = scmp.eq.s32.totalorder %s32, 0
      %p190 = por %p188, %p189
      %s192 = sadd.s32 %s191, 1
      %p195 = scmp.eq.s32.totalorder %s26, 1
      %p196 = scmp.ne.s32.totalorder %s191, %s193
      %p197 = scmp.eq.s32.totalorder %s26, 0
      %p198 = por %p196, %p197
      %p199 = scmp.ne.s32.totalorder %s191, %s193
      %p200 = scmp.eq.s32.totalorder %s31, 1
      %p201 = por %p199, %p200
      %p202 = scmp.ne.s32.totalorder %s193, %s194
      %p203 = scmp.eq.s32.totalorder %s31, 0
      %p204 = por %p202, %p203
      %p205 = scmp.ne.s32.totalorder %s193, %s194
      %p206 = scmp.eq.s32.totalorder %s32, 1
      %p207 = por %p205, %p206
      %p209 = scmp.ne.s32.totalorder %s194, %s208
      %p210 = scmp.eq.s32.totalorder %s32, 0
      %p211 = por %p209, %p210
      %s213 = sadd.s32 %s212, 1
      %p216 = scmp.eq.s32.totalorder %s26, 1
      %p217 = scmp.ne.s32.totalorder %s212, %s214
      %p218 = scmp.eq.s32.totalorder %s26, 0
      %p219 = por %p217, %p218
      %p220 = scmp.ne.s32.totalorder %s212, %s214
      %p221 = scmp.eq.s32.totalorder %s31, 1
      %p222 = por %p220, %p221
      %p223 = scmp.ne.s32.totalorder %s214, %s215
      %p224 = scmp.eq.s32.totalorder %s31, 0
      %p225 = por %p223, %p224
      %p226 = scmp.ne.s32.totalorder %s214, %s215
      %p227 = scmp.eq.s32.totalorder %s32, 1
      %p228 = por %p226, %p227
      %p230 = scmp.ne.s32.totalorder %s215, %s229
      %p231 = scmp.eq.s32.totalorder %s32, 0
      %p232 = por %p230, %p231
      %s234 = sadd.s32 %s233, 1
      %p237 = scmp.eq.s32.totalorder %s26, 1
      %p238 = scmp.ne.s32.totalorder %s233, %s235
      %p239 = scmp.eq.s32.totalorder %s26, 0
      %p240 = por %p238, %p239
      %p241 = scmp.ne.s32.totalorder %s233, %s235
      %p242 = scmp.eq.s32.totalorder %s31, 1
      %p243 = por %p241, %p242
      %p244 = scmp.ne.s32.totalorder %s235, %s236
      %p245 = scmp.eq.s32.totalorder %s31, 0
      %p246 = por %p244, %p245
      %p247 = scmp.ne.s32.totalorder %s235, %s236
      %p248 = scmp.eq.s32.totalorder %s32, 1
      %p249 = por %p247, %p248
      %p251 = scmp.ne.s32.totalorder %s236, %s250
      %p252 = scmp.eq.s32.totalorder %s32, 0
      %p253 = por %p251, %p252
      %s255 = sadd.s32 %s254, 1
      %p258 = scmp.eq.s32.totalorder %s26, 1
      %p259 = scmp.ne.s32.totalorder %s254, %s256
      %p260 = scmp.eq.s32.totalorder %s26, 0
      %p261 = por %p259, %p260
      %p262 = scmp.ne.s32.totalorder %s254, %s256
      %p263 = scmp.eq.s32.totalorder %s31, 1
      %p264 = por %p262, %p263
      %p265 = scmp.ne.s32.totalorder %s256, %s257
      %p266 = scmp.eq.s32.totalorder %s31, 0
      %p267 = por %p265, %p266
      %p268 = scmp.ne.s32.totalorder %s256, %s257
      %p269 = scmp.eq.s32.totalorder %s32, 1
      %p270 = por %p268, %p269
      %p272 = scmp.ne.s32.totalorder %s257, %s271
      %p273 = scmp.eq.s32.totalorder %s32, 0
      %p274 = por %p272, %p273
      %s276 = sadd.s32 %s275, 1
      %p279 = scmp.eq.s32.totalorder %s26, 1
      %p280 = scmp.ne.s32.totalorder %s275, %s277
      %p281 = scmp.eq.s32.totalorder %s26, 0
      %p282 = por %p280, %p281
      %p283 = scmp.ne.s32.totalorder %s275, %s277
      %p284 = scmp.eq.s32.totalorder %s31, 1
      %p285 = por %p283, %p284
      %p286 = scmp.ne.s32.totalorder %s277, %s278
      %p287 = scmp.eq.s32.totalorder %s31, 0
      %p288 = por %p286, %p287
      %p289 = scmp.ne.s32.totalorder %s277, %s278
      %p290 = scmp.eq.s32.totalorder %s32, 1
      %p291 = por %p289, %p290
      %p293 = scmp.ne.s32.totalorder %s278, %s292
      %p294 = scmp.eq.s32.totalorder %s32, 0
      %p295 = por %p293, %p294
      %s296 = ssub.s32 %s26, %s33
      %p297 = scmp.eq.s32.totalorder %s296, 0
      %s299 = sadd.s32 %s298, 1
      %s300 = scalar_select %p297, %s298, %s299
      %p303 = pneg %p297
      %p304 = scmp.eq.s32.totalorder %s26, 1
      %p305 = por %p303, %p304
      %p306 = scmp.ne.s32.totalorder %s298, %s301
      %p307 = scmp.eq.s32.totalorder %s26, 0
      %p308 = por %p306, %p307
      %p309 = scmp.ne.s32.totalorder %s298, %s301
      %p310 = scmp.eq.s32.totalorder %s31, 1
      %p311 = por %p309, %p310
      %p312 = scmp.ne.s32.totalorder %s301, %s302
      %p313 = scmp.eq.s32.totalorder %s31, 0
      %p314 = por %p312, %p313
      %p315 = scmp.ne.s32.totalorder %s301, %s302
      %p316 = scmp.eq.s32.totalorder %s32, 1
      %p317 = por %p315, %p316
      %p319 = scmp.ne.s32.totalorder %s302, %s318
      %p320 = scmp.eq.s32.totalorder %s32, 0
      %p321 = por %p319, %p320
      %s322 = ssub.s32 %s26, %s33
      %p323 = scmp.eq.s32.totalorder %s322, 0
      %s325 = sadd.s32 %s324, 1
      %s326 = scalar_select %p323, %s324, %s325
      %p329 = pneg %p323
      %p330 = scmp.eq.s32.totalorder %s26, 1
      %p331 = por %p329, %p330
      %p332 = scmp.ne.s32.totalorder %s324, %s327
      %p333 = scmp.eq.s32.totalorder %s26, 0
      %p334 = por %p332, %p333
      %p335 = scmp.ne.s32.totalorder %s324, %s327
      %p336 = scmp.eq.s32.totalorder %s31, 1
      %p337 = por %p335, %p336
      %p338 = scmp.ne.s32.totalorder %s327, %s328
      %p339 = scmp.eq.s32.totalorder %s31, 0
      %p340 = por %p338, %p339
      %p341 = scmp.ne.s32.totalorder %s327, %s328
      %p342 = scmp.eq.s32.totalorder %s32, 1
      %p343 = por %p341, %p342
      %p345 = scmp.ne.s32.totalorder %s328, %s344
      %p346 = scmp.eq.s32.totalorder %s32, 0
      %p347 = por %p345, %p346
      %p348 = scmp.le.s32.totalorder 1, %s26
      %p349 = scmp.lt.s32.totalorder %s26, 3
      %p350 = pnand %p348, %p349
      %p351 = pneg %p350
      // Predicated region
      $region9: #{attentional_propagation.1} parent=5 // pred_check
        _
      $region10: #{attentional_propagation.1} parent=5 // pred_check_branch
        %353 = sbr.rel (%p350) target = $region12
      $region11: #{attentional_propagation.1} parent=5 // pred_region
        %s354 = ssub.s32 %s26, 1
        // Predicated region
        $region13: #{attentional_propagation.1} parent=11 // pred_check
          %p355 = pneg %p99
        $region14: #{attentional_propagation.1} parent=11 // pred_check_branch
          %357 = sbr.rel (%p355) target = $region16
        $region15: #{attentional_propagation.1} parent=11 // pred_region
          _
        $region16: #{attentional_propagation.1} parent=11 // pred_fallthru
          _
        // Predicated region
        $region17: #{attentional_propagation.1} parent=11 // pred_check
          %p358 = pneg %p120
        $region18: #{attentional_propagation.1} parent=11 // pred_check_branch
          %360 = sbr.rel (%p358) target = $region20
        $region19: #{attentional_propagation.1} parent=11 // pred_region
          _
        $region20: #{attentional_propagation.1} parent=11 // pred_fallthru
          _
        // Predicated region
        $region21: #{attentional_propagation.1} parent=11 // pred_check
          %p361 = pneg %p141
        $region22: #{attentional_propagation.1} parent=11 // pred_check_branch
          %363 = sbr.rel (%p361) target = $region24
        $region23: #{attentional_propagation.1} parent=11 // pred_region
          _
        $region24: #{attentional_propagation.1} parent=11 // pred_fallthru
          _
        // Predicated region
        $region25: #{attentional_propagation.1} parent=11 // pred_check
          %p364 = pneg %p162
        $region26: #{attentional_propagation.1} parent=11 // pred_check_branch
          %366 = sbr.rel (%p364) target = $region28
        $region27: #{attentional_propagation.1} parent=11 // pred_region
          _
        $region28: #{attentional_propagation.1} parent=11 // pred_fallthru
          _
        // Predicated region
        $region29: #{attentional_propagation.1} parent=11 // pred_check
          %p367 = pneg %p183
        $region30: #{attentional_propagation.1} parent=11 // pred_check_branch
          %369 = sbr.rel (%p367) target = $region32
        $region31: #{attentional_propagation.1} parent=11 // pred_region
          _
        $region32: #{attentional_propagation.1} parent=11 // pred_fallthru
          _
        // Predicated region
        $region33: #{attentional_propagation.1} parent=11 // pred_check
          %p370 = pneg %p204
        $region34: #{attentional_propagation.1} parent=11 // pred_check_branch
          %372 = sbr.rel (%p370) target = $region36
        $region35: #{attentional_propagation.1} parent=11 // pred_region
          _
        $region36: #{attentional_propagation.1} parent=11 // pred_fallthru
          _
        // Predicated region
        $region37: #{attentional_propagation.1} parent=11 // pred_check
          %p373 = pneg %p225
        $region38: #{attentional_propagation.1} parent=11 // pred_check_branch
          %375 = sbr.rel (%p373) target = $region40
        $region39: #{attentional_propagation.1} parent=11 // pred_region
          _
        $region40: #{attentional_propagation.1} parent=11 // pred_fallthru
          _
        // Predicated region
        $region41: #{attentional_propagation.1} parent=11 // pred_check
          %p376 = pneg %p246
        $region42: #{attentional_propagation.1} parent=11 // pred_check_branch
          %378 = sbr.rel (%p376) target = $region44
        $region43: #{attentional_propagation.1} parent=11 // pred_region
          _
        $region44: #{attentional_propagation.1} parent=11 // pred_fallthru
          _
        // Predicated region
        $region45: #{attentional_propagation.1} parent=11 // pred_check
          %p379 = pneg %p267
        $region46: #{attentional_propagation.1} parent=11 // pred_check_branch
          %381 = sbr.rel (%p379) target = $region48
        $region47: #{attentional_propagation.1} parent=11 // pred_region
          _
        $region48: #{attentional_propagation.1} parent=11 // pred_fallthru
          _
        // Predicated region
        $region49: #{attentional_propagation.1} parent=11 // pred_check
          %p382 = pneg %p288
        $region50: #{attentional_propagation.1} parent=11 // pred_check_branch
          %384 = sbr.rel (%p382) target = $region52
        $region51: #{attentional_propagation.1} parent=11 // pred_region
          _
        $region52: #{attentional_propagation.1} parent=11 // pred_fallthru
          _
      $region12: #{attentional_propagation.1} parent=5 // pred_fallthru
        _
      %p385 = scmp.lt.s32.totalorder %s26, 2
      // Predicated region
      $region53: #{attentional_propagation.1} parent=5 // pred_check
        %p386 = pneg %p385
      $region54: #{attentional_propagation.1} parent=5 // pred_check_branch
        %388 = sbr.rel (%p386) target = $region56
      $region55: #{attentional_propagation.1} parent=5 // pred_region
        // Predicated region
        $region57: #{attentional_propagation.1} parent=55 // pred_check
          %p389 = pneg %p46
        $region58: #{attentional_propagation.1} parent=55 // pred_check_branch
          %391 = sbr.rel (%p389) target = $region60
        $region59: #{attentional_propagation.1} parent=55 // pred_region
          %p392 = scmp.lt.s32.totalorder %s26, 1
          %s393 = scalar_select %p392, %s26, 1
          %s394 = smul.addr %s393, 8
          %s395 = scalar_lea.vmem %s0, %s394
        $region60: #{attentional_propagation.1} parent=55 // pred_fallthru
          _
        // Predicated region
        $region61: #{attentional_propagation.1} parent=55 // pred_check
          %p396 = pneg %p72
        $region62: #{attentional_propagation.1} parent=55 // pred_check_branch
          %398 = sbr.rel (%p396) target = $region64
        $region63: #{attentional_propagation.1} parent=55 // pred_region
          %p399 = scmp.lt.s32.totalorder %s26, 1
          %s400 = scalar_select %p399, %s26, 1
          %s401 = smul.addr %s400, 2
          %s402 = smul.addr %s401, 8
          %s403 = scalar_lea.vmem %s1, %s402
        $region64: #{attentional_propagation.1} parent=55 // pred_fallthru
          _
      $region56: #{attentional_propagation.1} parent=5 // pred_fallthru
        _
      %p404 = scmp.le.s32.totalorder 1, %s26
      %p405 = scmp.lt.s32.totalorder %s26, 3
      %p406 = pnand %p404, %p405
      %p407 = pneg %p406
      // Predicated region
      $region65: #{attentional_propagation.1} parent=5 // pred_check
        _
      $region66: #{attentional_propagation.1} parent=5 // pred_check_branch
        %409 = sbr.rel (%p406) target = $region68
      $region67: #{attentional_propagation.1} parent=5 // pred_region
        %s410 = ssub.s32 %s26, 1
        %p411 = scmp.lt.s32.totalorder %s31, 1
        %s412 = scalar_select %p411, %s31, 1
        %s413 = smul.addr %s412, 8
        %s414 = scalar_lea.vmem %s0, %s413
        %p415 = pneg %p52
        %p416 = pneg %p49
        %p417 = scmp.lt.s32.totalorder %s31, 1
        %s418 = scalar_select %p417, %s31, 1
        %s419 = smul.addr %s418, 2
        %s420 = smul.addr %s419, 8
        %s421 = scalar_lea.vmem %s1, %s420
        %p422 = pneg %p78
        %p423 = pneg %p75
        %p424 = pneg %p99
        %p425 = pneg %p96
        %p426 = pneg %p120
        %p427 = pneg %p117
        %p428 = pneg %p141
        %p429 = pneg %p138
        %p430 = pneg %p162
        %p431 = pneg %p159
        %p432 = pneg %p183
        %p433 = pneg %p180
        %p434 = pneg %p204
        %p435 = pneg %p201
        %p436 = pneg %p225
        %p437 = pneg %p222
        %p438 = pneg %p246
        %p439 = pneg %p243
        %p440 = pneg %p267
        %p441 = pneg %p264
        %p442 = pneg %p288
        %p443 = pneg %p285
        %p444 = pneg %p314
        %p445 = pneg %p311
        %s446 = sand.u32 %s301, 1
        %s447 = scalar_lea.sflag [#allocation3], %s446
        %s448 = sand.u32 %s301, 1
        %s449 = smul.addr %s448, 8
        %s450 = scalar_lea.vmem [#allocation2], %s449
        %p451 = pneg %p340
        %p452 = pneg %p337
        %s453 = sand.u32 %s327, 1
        %s454 = scalar_lea.sflag [#allocation5], %s453
        %s455 = sand.u32 %s327, 1
        %s456 = smul.addr %s455, 8
        %s457 = scalar_lea.vmem [#allocation4], %s456
        %p458 = scmp.lt.s32.totalorder %s31, 1
        %s459 = scalar_select %p458, %s31, 1
        %s460 = smul.addr %s459, 8
        %s461 = scalar_lea.vmem %s0, %s460
        %p462 = scmp.lt.s32.totalorder %s31, 1
        %s463 = scalar_select %p462, %s31, 1
        %s464 = smul.addr %s463, 2
        %s465 = smul.addr %s464, 8
        %s466 = scalar_lea.vmem %s1, %s465
        %v467 = vld [vmem:[%s461] sm:$0xff]
        %v468 = vld [vmem:[%s466] sm:$0xff]
        %v469 = vld [vmem:[%s466 + $0x8] sm:$0xff]
        %v470 = vld [vmem:[%s2] sm:$0xff]
        %v471 = vld [vmem:[%s2 + $0x8] sm:$0xff]
        %v472 = vld [vmem:[%s2 + $0x10] sm:$0xff]
        %v473 = vld [vmem:[%s2 + $0x18] sm:$0xff]
        %v474 = vld [vmem:[%s3] sm:$0x1]
        %v476 = vlaneseq
        %v477 = vshrl.u32 %v476, 7
        %v478 = vsub.s32 0, %v477
        %v479 = vrot.slane %v474, %v478
        %vm481 = vcmask 261120
        %v483 = vsel %vm481, %v467, 0
        %485 = vmatprep.subr.mxu0 0.0
        %486 = vmatpush1.msra.mxu0 %v470
        %487 = vmatprep.subr.mxu0 0.0
        %488 = vmatpush1.msra.mxu0 %v471
        %489 = vmatprep.subr.mxu0 0.0
        %490 = vmatpush1.msra.mxu0 %v472
        %491 = vmatprep.subr.mxu0 0.0
        %492 = vmatpush1.msra.mxu0 %v473
        %493 = vmatprep.subr.mxu0 0.0
        %494 = vmatpush1.msra.mxu0 0.0
        %495 = vmatprep.subr.mxu0 0.0
        %496 = vmatpush1.msra.mxu0 0.0
        %497 = vmatprep.subr.mxu0 0.0
        %498 = vmatpush1.msra.mxu0 0.0
        %499 = vmatprep.subr.mxu0 0.0
        %500 = vmatpush1.msra.mxu0 0.0
        %501 = vmatprep.subr.mxu0 0.0
        %502 = vmatpush1.msra.mxu0 0.0
        %503 = vmatprep.subr.mxu0 0.0
        %504 = vmatpush1.msra.mxu0 0.0
        %505 = vmatprep.subr.mxu0 0.0
        %506 = vmatpush1.msra.mxu0 0.0
        %507 = vmatprep.subr.mxu0 0.0
        %508 = vmatpush1.msra.mxu0 0.0
        %509 = vmatprep.subr.mxu0 0.0
        %510 = vmatpush1.msra.mxu0 0.0
        %511 = vmatprep.subr.mxu0 0.0
        %512 = vmatpush1.msra.mxu0 0.0
        %513 = vmatprep.subr.mxu0 0.0
        %514 = vmatpush1.msra.mxu0 0.0
        %515 = vmatprep.subr.mxu0 0.0
        %516 = vmatpush1.msra.mxu0 0.0
        %517 = vmatprep.subr.mxu0 0.0
        %518 = vmatpush1.msra.mxu0 0.0
        %519 = vmatprep.subr.mxu0 0.0
        %520 = vmatpush1.msra.mxu0 0.0
        %521 = vmatprep.subr.mxu0 0.0
        %522 = vmatpush1.msra.mxu0 0.0
        %523 = vmatprep.subr.mxu0 0.0
        %524 = vmatpush1.msra.mxu0 0.0
        %525 = vmatprep.subr.mxu0 0.0
        %526 = vmatpush1.msra.mxu0 0.0
        %527 = vmatprep.subr.mxu0 0.0
        %528 = vmatpush1.msra.mxu0 0.0
        %529 = vmatprep.subr.mxu0 0.0
        %530 = vmatpush1.msra.mxu0 0.0
        %531 = vmatprep.subr.mxu0 0.0
        %532 = vmatpush1.msra.mxu0 0.0
        %533 = vmatprep.subr.mxu0 0.0
        %534 = vmatpush1.msra.mxu0 0.0
        %535 = vmatprep.subr.mxu0 0.0
        %536 = vmatpush1.msra.mxu0 0.0
        %537 = vmatprep.subr.mxu0 0.0
        %538 = vmatpush1.msra.mxu0 0.0
        %539 = vmatprep.subr.mxu0 0.0
        %540 = vmatpush1.msra.mxu0 0.0
        %541 = vmatprep.subr.mxu0 0.0
        %542 = vmatpush1.msra.mxu0 0.0
        %543 = vmatprep.subr.mxu0 0.0
        %544 = vmatpush1.msra.mxu0 0.0
        %545 = vmatprep.subr.mxu0 0.0
        %546 = vmatpush1.msra.mxu0 0.0
        %547 = vmatprep.subr.mxu0 0.0
        %548 = vmatpush1.msra.mxu0 0.0
        %549 = vmatprep.mubr.f32.mxu0 0.0
        %550 = vmatmul.mubr.f32.gmra.mrb[0].mxu0 %v483
        %v551 = vpop.f32.mrb[0].mxu0
        %v552 = vadd.f32 %v479, %v551
        %v553 = vpop.f32.mrb[0].mxu0
        %554 = vdwg.mxu0
        %v555 = vld [vmem:[%s4] sm:$0xff]
        %v556 = vld [vmem:[%s4 + $0x8] sm:$0xff]
        %v557 = vld [vmem:[%s4 + $0x10] sm:$0xff]
        %v558 = vld [vmem:[%s4 + $0x18] sm:$0xff]
        %v559 = vld [vmem:[%s5] sm:$0x1]
        %v561 = vlaneseq
        %v562 = vshrl.u32 %v561, 7
        %v563 = vsub.s32 0, %v562
        %v564 = vrot.slane %v559, %v563
        %v567 = vsel %vm481, %v468, 0
        %v570 = vsel %vm481, %v469, 0
        %572 = vmatprep.subr.mxu0 0.0
        %573 = vmatpush1.msra.mxu0 %v555
        %574 = vmatprep.subr.mxu0 0.0
        %575 = vmatpush1.msra.mxu0 %v556
        %576 = vmatprep.subr.mxu0 0.0
        %577 = vmatpush1.msra.mxu0 %v557
        %578 = vmatprep.subr.mxu0 0.0
        %579 = vmatpush1.msra.mxu0 %v558
        %580 = vmatprep.subr.mxu0 0.0
        %581 = vmatpush1.msra.mxu0 0.0
        %582 = vmatprep.subr.mxu0 0.0
        %583 = vmatpush1.msra.mxu0 0.0
        %584 = vmatprep.subr.mxu0 0.0
        %585 = vmatpush1.msra.mxu0 0.0
        %586 = vmatprep.subr.mxu0 0.0
        %587 = vmatpush1.msra.mxu0 0.0
        %588 = vmatprep.subr.mxu0 0.0
        %589 = vmatpush1.msra.mxu0 0.0
        %590 = vmatprep.subr.mxu0 0.0
        %591 = vmatpush1.msra.mxu0 0.0
        %592 = vmatprep.subr.mxu0 0.0
        %593 = vmatpush1.msra.mxu0 0.0
        %594 = vmatprep.subr.mxu0 0.0
        %595 = vmatpush1.msra.mxu0 0.0
        %596 = vmatprep.subr.mxu0 0.0
        %597 = vmatpush1.msra.mxu0 0.0
        %598 = vmatprep.subr.mxu0 0.0
        %599 = vmatpush1.msra.mxu0 0.0
        %600 = vmatprep.subr.mxu0 0.0
        %601 = vmatpush1.msra.mxu0 0.0
        %602 = vmatprep.subr.mxu0 0.0
        %603 = vmatpush1.msra.mxu0 0.0
        %604 = vmatprep.subr.mxu0 0.0
        %605 = vmatpush1.msra.mxu0 0.0
        %606 = vmatprep.subr.mxu0 0.0
        %607 = vmatpush1.msra.mxu0 0.0
        %608 = vmatprep.subr.mxu0 0.0
        %609 = vmatpush1.msra.mxu0 0.0
        %610 = vmatprep.subr.mxu0 0.0
        %611 = vmatpush1.msra.mxu0 0.0
        %612 = vmatprep.subr.mxu0 0.0
        %613 = vmatpush1.msra.mxu0 0.0
        %614 = vmatprep.subr.mxu0 0.0
        %615 = vmatpush1.msra.mxu0 0.0
        %616 = vmatprep.subr.mxu0 0.0
        %617 = vmatpush1.msra.mxu0 0.0
        %618 = vmatprep.subr.mxu0 0.0
        %619 = vmatpush1.msra.mxu0 0.0
        %620 = vmatprep.subr.mxu0 0.0
        %621 = vmatpush1.msra.mxu0 0.0
        %622 = vmatprep.subr.mxu0 0.0
        %623 = vmatpush1.msra.mxu0 0.0
        %624 = vmatprep.subr.mxu0 0.0
        %625 = vmatpush1.msra.mxu0 0.0
        %626 = vmatprep.subr.mxu0 0.0
        %627 = vmatpush1.msra.mxu0 0.0
        %628 = vmatprep.subr.mxu0 0.0
        %629 = vmatpush1.msra.mxu0 0.0
        %630 = vmatprep.subr.mxu0 0.0
        %631 = vmatpush1.msra.mxu0 0.0
        %632 = vmatprep.subr.mxu0 0.0
        %633 = vmatpush1.msra.mxu0 0.0
        %634 = vmatprep.subr.mxu0 0.0
        %635 = vmatpush1.msra.mxu0 0.0
        %636 = vmatprep.mubr.f32.mxu0 0.0
        %637 = vmatmul.mubr.f32.gmra.mrb[0].mxu0 %v567
        %v638 = vpop.f32.mrb[0].mxu0
        %v639 = vadd.f32 %v564, %v638
        %v640 = vpop.f32.mrb[0].mxu0
        %641 = vmatprep.mubr.f32.mxu0 0.0
        %642 = vmatmul.mubr.f32.gmra.mrb[0].mxu0 %v570
        %v643 = vpop.f32.mrb[0].mxu0
        %v644 = vadd.f32 %v564, %v643
        %v645 = vpop.f32.mrb[0].mxu0
        %646 = vdwg.mxu0
        %v647 = vld [vmem:[%s6] sm:$0xff]
        %v648 = vld [vmem:[%s6 + $0x8] sm:$0xff]
        %v649 = vld [vmem:[%s6 + $0x10] sm:$0xff]
        %v650 = vld [vmem:[%s6 + $0x18] sm:$0xff]
        %vm651 = vcmask 64512
        %v653 = vsel %vm651, %v552, 0
        %v656 = vsel %vm651, %v639, 0
        %v659 = vsel %vm651, %v644, 0
        %661 = vmatprep.subr.mxu0 0.0
        %662 = vmatpush1.xpose.msra.mxu0 %v656
        %663 = vmatprep.subr.mxu0 0.0
        %664 = vmatpush1.xpose.msra.mxu0 %v659
        %665 = vmatprep.subr.mxu0 0.0
        %666 = vmatpush1.xpose.msra.mxu0 0.0
        %667 = vmatprep.subr.mxu0 0.0
        %668 = vmatpush1.xpose.msra.mxu0 0.0
        %669 = vmatprep.subr.mxu0 0.0
        %670 = vmatpush1.xpose.msra.mxu0 0.0
        %671 = vmatprep.subr.mxu0 0.0
        %672 = vmatpush1.xpose.msra.mxu0 0.0
        %673 = vmatprep.subr.mxu0 0.0
        %674 = vmatpush1.xpose.msra.mxu0 0.0
        %675 = vmatprep.subr.mxu0 0.0
        %676 = vmatpush1.xpose.msra.mxu0 0.0
        %677 = vmatprep.subr.mxu0 0.0
        %678 = vmatpush1.xpose.msra.mxu0 0.0
        %679 = vmatprep.subr.mxu0 0.0
        %680 = vmatpush1.xpose.msra.mxu0 0.0
        %681 = vmatprep.subr.mxu0 0.0
        %682 = vmatpush1.xpose.msra.mxu0 0.0
        %683 = vmatprep.subr.mxu0 0.0
        %684 = vmatpush1.xpose.msra.mxu0 0.0
        %685 = vmatprep.subr.mxu0 0.0
        %686 = vmatpush1.xpose.msra.mxu0 0.0
        %687 = vmatprep.subr.mxu0 0.0
        %688 = vmatpush1.xpose.msra.mxu0 0.0
        %689 = vmatprep.subr.mxu0 0.0
        %690 = vmatpush1.xpose.msra.mxu0 0.0
        %691 = vmatprep.subr.mxu0 0.0
        %692 = vmatpush1.xpose.msra.mxu0 0.0
        %693 = vmatprep.subr.mxu0 0.0
        %694 = vmatpush1.xpose.msra.mxu0 0.0
        %695 = vmatprep.subr.mxu0 0.0
        %696 = vmatpush1.xpose.msra.mxu0 0.0
        %697 = vmatprep.subr.mxu0 0.0
        %698 = vmatpush1.xpose.msra.mxu0 0.0
        %699 = vmatprep.subr.mxu0 0.0
        %700 = vmatpush1.xpose.msra.mxu0 0.0
        %701 = vmatprep.subr.mxu0 0.0
        %702 = vmatpush1.xpose.msra.mxu0 0.0
        %703 = vmatprep.subr.mxu0 0.0
        %704 = vmatpush1.xpose.msra.mxu0 0.0
        %705 = vmatprep.subr.mxu0 0.0
        %706 = vmatpush1.xpose.msra.mxu0 0.0
        %707 = vmatprep.subr.mxu0 0.0
        %708 = vmatpush1.xpose.msra.mxu0 0.0
        %709 = vmatprep.subr.mxu0 0.0
        %710 = vmatpush1.xpose.msra.mxu0 0.0
        %711 = vmatprep.subr.mxu0 0.0
        %712 = vmatpush1.xpose.msra.mxu0 0.0
        %713 = vmatprep.subr.mxu0 0.0
        %714 = vmatpush1.xpose.msra.mxu0 0.0
        %715 = vmatprep.subr.mxu0 0.0
        %716 = vmatpush1.xpose.msra.mxu0 0.0
        %717 = vmatprep.subr.mxu0 0.0
        %718 = vmatpush1.xpose.msra.mxu0 0.0
        %719 = vmatprep.subr.mxu0 0.0
        %720 = vmatpush1.xpose.msra.mxu0 0.0
        %721 = vmatprep.subr.mxu0 0.0
        %722 = vmatpush1.xpose.msra.mxu0 0.0
        %723 = vmatprep.subr.mxu0 0.0
        %724 = vmatpush1.xpose.msra.mxu0 0.0
        %725 = vmatprep.mubr.f32.mxu0 0.0
        %726 = vmatmul.mubr.f32.gmra.mrb[0].mxu0 %v653
        %v727 = vpop.f32.mrb[0].mxu0
        %v728 = vadd.f32 0.0, %v727
        %v729 = vpop.f32.mrb[0].mxu0
        %730 = vdwg.mxu0
        %v731 = vmul.f32 %v728, 0.35355338
        %v732 = vadd.f32 %v731, 0.0
        %vm733 = vcmask 130048
        %v734 = vsel %vm733, %v731, -inf
        %735 = vmax.xlane.f32.xlu0 %v734
        %v736 = vpop.xlane.xlu0 %735
        %v737 = vsub.f32 %v731, %v736
        %v738 = vmul.f32 %v737, 1.442695
        %v739 = vpow.pop %v738
        %v740 = vsel %vm733, %v739, 0.0
        %741 = vadd.xlane.f32.xlu0 %v740
        %v742 = vpop.xlane.xlu0 %741
        %v743 = vrcp.pop %v742
        %v744 = vmul.f32 %v739, %v743
        %745 = vrot.lane.b32.xlu0 %v639, 96
        %v746 = vpop.permute.xlu0 %745
        %747 = vrot.lane.b32.xlu0 %v644, 96
        %v748 = vpop.permute.xlu0 %747
        %v752 = vsel %vm733, %v744, 0
        %754 = vmatprep.subr.mxu0 0.0
        %755 = vmatpush1.msra.mxu0 %v746
        %756 = vmatprep.subr.mxu0 0.0
        %757 = vmatpush1.msra.mxu0 %v748
        %758 = vmatprep.subr.mxu0 0.0
        %759 = vmatpush1.msra.mxu0 0.0
        %760 = vmatprep.subr.mxu0 0.0
        %761 = vmatpush1.msra.mxu0 0.0
        %762 = vmatprep.subr.mxu0 0.0
        %763 = vmatpush1.msra.mxu0 0.0
        %764 = vmatprep.subr.mxu0 0.0
        %765 = vmatpush1.msra.mxu0 0.0
        %766 = vmatprep.subr.mxu0 0.0
        %767 = vmatpush1.msra.mxu0 0.0
        %768 = vmatprep.subr.mxu0 0.0
        %769 = vmatpush1.msra.mxu0 0.0
        %770 = vmatprep.subr.mxu0 0.0
        %771 = vmatpush1.msra.mxu0 0.0
        %772 = vmatprep.subr.mxu0 0.0
        %773 = vmatpush1.msra.mxu0 0.0
        %774 = vmatprep.subr.mxu0 0.0
        %775 = vmatpush1.msra.mxu0 0.0
        %776 = vmatprep.subr.mxu0 0.0
        %777 = vmatpush1.msra.mxu0 0.0
        %778 = vmatprep.subr.mxu0 0.0
        %779 = vmatpush1.msra.mxu0 0.0
        %780 = vmatprep.subr.mxu0 0.0
        %781 = vmatpush1.msra.mxu0 0.0
        %782 = vmatprep.subr.mxu0 0.0
        %783 = vmatpush1.msra.mxu0 0.0
        %784 = vmatprep.subr.mxu0 0.0
        %785 = vmatpush1.msra.mxu0 0.0
        %786 = vmatprep.subr.mxu0 0.0
        %787 = vmatpush1.msra.mxu0 0.0
        %788 = vmatprep.subr.mxu0 0.0
        %789 = vmatpush1.msra.mxu0 0.0
        %790 = vmatprep.subr.mxu0 0.0
        %791 = vmatpush1.msra.mxu0 0.0
        %792 = vmatprep.subr.mxu0 0.0
        %793 = vmatpush1.msra.mxu0 0.0
        %794 = vmatprep.subr.mxu0 0.0
        %795 = vmatpush1.msra.mxu0 0.0
        %796 = vmatprep.subr.mxu0 0.0
        %797 = vmatpush1.msra.mxu0 0.0
        %798 = vmatprep.subr.mxu0 0.0
        %799 = vmatpush1.msra.mxu0 0.0
        %800 = vmatprep.subr.mxu0 0.0
        %801 = vmatpush1.msra.mxu0 0.0
        %802 = vmatprep.subr.mxu0 0.0
        %803 = vmatpush1.msra.mxu0 0.0
        %804 = vmatprep.subr.mxu0 0.0
        %805 = vmatpush1.msra.mxu0 0.0
        %806 = vmatprep.subr.mxu0 0.0
        %807 = vmatpush1.msra.mxu0 0.0
        %808 = vmatprep.subr.mxu0 0.0
        %809 = vmatpush1.msra.mxu0 0.0
        %810 = vmatprep.subr.mxu0 0.0
        %811 = vmatpush1.msra.mxu0 0.0
        %812 = vmatprep.subr.mxu0 0.0
        %813 = vmatpush1.msra.mxu0 0.0
        %814 = vmatprep.subr.mxu0 0.0
        %815 = vmatpush1.msra.mxu0 0.0
        %816 = vmatprep.subr.mxu0 0.0
        %817 = vmatpush1.msra.mxu0 0.0
        %818 = vmatprep.mubr.f32.mxu0 0.0
        %819 = vmatmul.mubr.f32.gmra.mrb[0].mxu0 %v752
        %v820 = vpop.f32.mrb[0].mxu0
        %v821 = vadd.f32 0.0, %v820
        %v822 = vpop.f32.mrb[0].mxu0
        %823 = vdwg.mxu0
        %824 = vrot.lane.b32.xlu0 %v552, 120
        %v825 = vpop.permute.xlu0 %824
        %826 = vrot.lane.b32.xlu0 %v639, 120
        %v827 = vpop.permute.xlu0 %826
        %828 = vrot.lane.b32.xlu0 %v644, 120
        %v829 = vpop.permute.xlu0 %828
        %v830 = vsel %vm651, %v825, 0
        %v832 = vsel %vm651, %v827, 0
        %v834 = vsel %vm651, %v829, 0
        %836 = vmatprep.subr.mxu0 0.0
        %837 = vmatpush1.xpose.msra.mxu0 %v832
        %838 = vmatprep.subr.mxu0 0.0
        %839 = vmatpush1.xpose.msra.mxu0 %v834
        %840 = vmatprep.subr.mxu0 0.0
        %841 = vmatpush1.xpose.msra.mxu0 0.0
        %842 = vmatprep.subr.mxu0 0.0
        %843 = vmatpush1.xpose.msra.mxu0 0.0
        %844 = vmatprep.subr.mxu0 0.0
        %845 = vmatpush1.xpose.msra.mxu0 0.0
        %846 = vmatprep.subr.mxu0 0.0
        %847 = vmatpush1.xpose.msra.mxu0 0.0
        %848 = vmatprep.subr.mxu0 0.0
        %849 = vmatpush1.xpose.msra.mxu0 0.0
        %850 = vmatprep.subr.mxu0 0.0
        %851 = vmatpush1.xpose.msra.mxu0 0.0
        %852 = vmatprep.subr.mxu0 0.0
        %853 = vmatpush1.xpose.msra.mxu0 0.0
        %854 = vmatprep.subr.mxu0 0.0
        %855 = vmatpush1.xpose.msra.mxu0 0.0
        %856 = vmatprep.subr.mxu0 0.0
        %857 = vmatpush1.xpose.msra.mxu0 0.0
        %858 = vmatprep.subr.mxu0 0.0
        %859 = vmatpush1.xpose.msra.mxu0 0.0
        %860 = vmatprep.subr.mxu0 0.0
        %861 = vmatpush1.xpose.msra.mxu0 0.0
        %862 = vmatprep.subr.mxu0 0.0
        %863 = vmatpush1.xpose.msra.mxu0 0.0
        %864 = vmatprep.subr.mxu0 0.0
        %865 = vmatpush1.xpose.msra.mxu0 0.0
        %866 = vmatprep.subr.mxu0 0.0
        %867 = vmatpush1.xpose.msra.mxu0 0.0
        %868 = vmatprep.subr.mxu0 0.0
        %869 = vmatpush1.xpose.msra.mxu0 0.0
        %870 = vmatprep.subr.mxu0 0.0
        %871 = vmatpush1.xpose.msra.mxu0 0.0
        %872 = vmatprep.subr.mxu0 0.0
        %873 = vmatpush1.xpose.msra.mxu0 0.0
        %874 = vmatprep.subr.mxu0 0.0
        %875 = vmatpush1.xpose.msra.mxu0 0.0
        %876 = vmatprep.subr.mxu0 0.0
        %877 = vmatpush1.xpose.msra.mxu0 0.0
        %878 = vmatprep.subr.mxu0 0.0
        %879 = vmatpush1.xpose.msra.mxu0 0.0
        %880 = vmatprep.subr.mxu0 0.0
        %881 = vmatpush1.xpose.msra.mxu0 0.0
        %882 = vmatprep.subr.mxu0 0.0
        %883 = vmatpush1.xpose.msra.mxu0 0.0
        %884 = vmatprep.subr.mxu0 0.0
        %885 = vmatpush1.xpose.msra.mxu0 0.0
        %886 = vmatprep.subr.mxu0 0.0
        %887 = vmatpush1.xpose.msra.mxu0 0.0
        %888 = vmatprep.subr.mxu0 0.0
        %889 = vmatpush1.xpose.msra.mxu0 0.0
        %890 = vmatprep.subr.mxu0 0.0
        %891 = vmatpush1.xpose.msra.mxu0 0.0
        %892 = vmatprep.subr.mxu0 0.0
        %893 = vmatpush1.xpose.msra.mxu0 0.0
        %894 = vmatprep.subr.mxu0 0.0
        %895 = vmatpush1.xpose.msra.mxu0 0.0
        %896 = vmatprep.subr.mxu0 0.0
        %897 = vmatpush1.xpose.msra.mxu0 0.0
        %898 = vmatprep.subr.mxu0 0.0
        %899 = vmatpush1.xpose.msra.mxu0 0.0
        %900 = vmatprep.mubr.f32.mxu0 0.0
        %901 = vmatmul.mubr.f32.gmra.mrb[0].mxu0 %v830
        %v902 = vpop.f32.mrb[0].mxu0
        %v903 = vadd.f32 0.0, %v902
        %v904 = vpop.f32.mrb[0].mxu0
        %905 = vdwg.mxu0
        %v906 = vmul.f32 %v903, 0.35355338
        %v907 = vadd.f32 %v732, %v906
        %v908 = vsel %vm733, %v906, -inf
        %909 = vmax.xlane.f32.xlu0 %v908
        %v910 = vpop.xlane.xlu0 %909
        %v911 = vsub.f32 %v906, %v910
        %v912 = vmul.f32 %v911, 1.442695
        %v913 = vpow.pop %v912
        %v914 = vsel %vm733, %v913, 0.0
        %915 = vadd.xlane.f32.xlu0 %v914
        %v916 = vpop.xlane.xlu0 %915
        %v917 = vrcp.pop %v916
        %v918 = vmul.f32 %v913, %v917
        %919 = vrot.lane.b32.xlu0 %v639, 88
        %v920 = vpop.permute.xlu0 %919
        %921 = vrot.lane.b32.xlu0 %v644, 88
        %v922 = vpop.permute.xlu0 %921
        %v926 = vsel %vm733, %v918, 0
        %928 = vmatprep.subr.mxu0 0.0
        %929 = vmatpush1.msra.mxu0 %v920
        %930 = vmatprep.subr.mxu0 0.0
        %931 = vmatpush1.msra.mxu0 %v922
        %932 = vmatprep.subr.mxu0 0.0
        %933 = vmatpush1.msra.mxu0 0.0
        %934 = vmatprep.subr.mxu0 0.0
        %935 = vmatpush1.msra.mxu0 0.0
        %936 = vmatprep.subr.mxu0 0.0
        %937 = vmatpush1.msra.mxu0 0.0
        %938 = vmatprep.subr.mxu0 0.0
        %939 = vmatpush1.msra.mxu0 0.0
        %940 = vmatprep.subr.mxu0 0.0
        %941 = vmatpush1.msra.mxu0 0.0
        %942 = vmatprep.subr.mxu0 0.0
        %943 = vmatpush1.msra.mxu0 0.0
        %944 = vmatprep.subr.mxu0 0.0
        %945 = vmatpush1.msra.mxu0 0.0
        %946 = vmatprep.subr.mxu0 0.0
        %947 = vmatpush1.msra.mxu0 0.0
        %948 = vmatprep.subr.mxu0 0.0
        %949 = vmatpush1.msra.mxu0 0.0
        %950 = vmatprep.subr.mxu0 0.0
        %951 = vmatpush1.msra.mxu0 0.0
        %952 = vmatprep.subr.mxu0 0.0
        %953 = vmatpush1.msra.mxu0 0.0
        %954 = vmatprep.subr.mxu0 0.0
        %955 = vmatpush1.msra.mxu0 0.0
        %956 = vmatprep.subr.mxu0 0.0
        %957 = vmatpush1.msra.mxu0 0.0
        %958 = vmatprep.subr.mxu0 0.0
        %959 = vmatpush1.msra.mxu0 0.0
        %960 = vmatprep.subr.mxu0 0.0
        %961 = vmatpush1.msra.mxu0 0.0
        %962 = vmatprep.subr.mxu0 0.0
        %963 = vmatpush1.msra.mxu0 0.0
        %964 = vmatprep.subr.mxu0 0.0
        %965 = vmatpush1.msra.mxu0 0.0
        %966 = vmatprep.subr.mxu0 0.0
        %967 = vmatpush1.msra.mxu0 0.0
        %968 = vmatprep.subr.mxu0 0.0
        %969 = vmatpush1.msra.mxu0 0.0
        %970 = vmatprep.subr.mxu0 0.0
        %971 = vmatpush1.msra.mxu0 0.0
        %972 = vmatprep.subr.mxu0 0.0
        %973 = vmatpush1.msra.mxu0 0.0
        %974 = vmatprep.subr.mxu0 0.0
        %975 = vmatpush1.msra.mxu0 0.0
        %976 = vmatprep.subr.mxu0 0.0
        %977 = vmatpush1.msra.mxu0 0.0
        %978 = vmatprep.subr.mxu0 0.0
        %979 = vmatpush1.msra.mxu0 0.0
        %980 = vmatprep.subr.mxu0 0.0
        %981 = vmatpush1.msra.mxu0 0.0
        %982 = vmatprep.subr.mxu0 0.0
        %983 = vmatpush1.msra.mxu0 0.0
        %984 = vmatprep.subr.mxu0 0.0
        %985 = vmatpush1.msra.mxu0 0.0
        %986 = vmatprep.subr.mxu0 0.0
        %987 = vmatpush1.msra.mxu0 0.0
        %988 = vmatprep.subr.mxu0 0.0
        %989 = vmatpush1.msra.mxu0 0.0
        %990 = vmatprep.subr.mxu0 0.0
        %991 = vmatpush1.msra.mxu0 0.0
        %992 = vmatprep.mubr.f32.mxu0 0.0
        %993 = vmatmul.mubr.f32.gmra.mrb[0].mxu0 %v926
        %v994 = vpop.f32.mrb[0].mxu0
        %v995 = vadd.f32 0.0, %v994
        %v996 = vpop.f32.mrb[0].mxu0
        %997 = vdwg.mxu0
        %v999 = vsel %vm651, %v995, 0
        %1001 = vmatprep.subr.mxu0 0.0
        %1002 = vmatpush1.msra.mxu0 %v648
        %1003 = vmatprep.subr.mxu0 0.0
        %1004 = vmatpush1.msra.mxu0 0.0
        %1005 = vmatprep.subr.mxu0 0.0
        %1006 = vmatpush1.msra.mxu0 0.0
        %1007 = vmatprep.subr.mxu0 0.0
        %1008 = vmatpush1.msra.mxu0 0.0
        %1009 = vmatprep.subr.mxu0 0.0
        %1010 = vmatpush1.msra.mxu0 0.0
        %1011 = vmatprep.subr.mxu0 0.0
        %1012 = vmatpush1.msra.mxu0 0.0
        %1013 = vmatprep.subr.mxu0 0.0
        %1014 = vmatpush1.msra.mxu0 0.0
        %1015 = vmatprep.subr.mxu0 0.0
        %1016 = vmatpush1.msra.mxu0 0.0
        %1017 = vmatprep.subr.mxu0 0.0
        %1018 = vmatpush1.msra.mxu0 0.0
        %1019 = vmatprep.subr.mxu0 0.0
        %1020 = vmatpush1.msra.mxu0 0.0
        %1021 = vmatprep.subr.mxu0 0.0
        %1022 = vmatpush1.msra.mxu0 0.0
        %1023 = vmatprep.subr.mxu0 0.0
        %1024 = vmatpush1.msra.mxu0 0.0
        %1025 = vmatprep.subr.mxu0 0.0
        %1026 = vmatpush1.msra.mxu0 0.0
        %1027 = vmatprep.subr.mxu0 0.0
        %1028 = vmatpush1.msra.mxu0 0.0
        %1029 = vmatprep.subr.mxu0 0.0
        %1030 = vmatpush1.msra.mxu0 0.0
        %1031 = vmatprep.subr.mxu0 0.0
        %1032 = vmatpush1.msra.mxu0 0.0
        %1033 = vmatprep.subr.mxu0 0.0
        %1034 = vmatpush1.msra.mxu0 0.0
        %1035 = vmatprep.subr.mxu0 0.0
        %1036 = vmatpush1.msra.mxu0 0.0
        %1037 = vmatprep.subr.mxu0 0.0
        %1038 = vmatpush1.msra.mxu0 0.0
        %1039 = vmatprep.subr.mxu0 0.0
        %1040 = vmatpush1.msra.mxu0 0.0
        %1041 = vmatprep.subr.mxu0 0.0
        %1042 = vmatpush1.msra.mxu0 0.0
        %1043 = vmatprep.subr.mxu0 0.0
        %1044 = vmatpush1.msra.mxu0 0.0
        %1045 = vmatprep.subr.mxu0 0.0
        %1046 = vmatpush1.msra.mxu0 0.0
        %1047 = vmatprep.subr.mxu0 0.0
        %1048 = vmatpush1.msra.mxu0 0.0
        %1049 = vmatprep.subr.mxu0 0.0
        %1050 = vmatpush1.msra.mxu0 0.0
        %1051 = vmatprep.subr.mxu0 0.0
        %1052 = vmatpush1.msra.mxu0 0.0
        %1053 = vmatprep.subr.mxu0 0.0
        %1054 = vmatpush1.msra.mxu0 0.0
        %1055 = vmatprep.subr.mxu0 0.0
        %1056 = vmatpush1.msra.mxu0 0.0
        %1057 = vmatprep.subr.mxu0 0.0
        %1058 = vmatpush1.msra.mxu0 0.0
        %1059 = vmatprep.subr.mxu0 0.0
        %1060 = vmatpush1.msra.mxu0 0.0
        %1061 = vmatprep.subr.mxu0 0.0
        %1062 = vmatpush1.msra.mxu0 0.0
        %1063 = vmatprep.subr.mxu0 0.0
        %1064 = vmatpush1.msra.mxu0 0.0
        %1065 = vmatprep.mubr.f32.mxu0 0.0
        %1066 = vmatmul.mubr.f32.gmra.mrb[0].mxu0 %v999
        %v1067 = vpop.f32.mrb[0].mxu0
        %v1068 = vadd.f32 0.0, %v1067
        %v1069 = vpop.f32.mrb[0].mxu0
        %1070 = vdwg.mxu0
        %v1072 = vsel %vm651, %v821, 0
        %1074 = vmatprep.subr.mxu0 0.0
        %1075 = vmatpush1.msra.mxu0 %v647
        %1076 = vmatprep.subr.mxu0 0.0
        %1077 = vmatpush1.msra.mxu0 0.0
        %1078 = vmatprep.subr.mxu0 0.0
        %1079 = vmatpush1.msra.mxu0 0.0
        %1080 = vmatprep.subr.mxu0 0.0
        %1081 = vmatpush1.msra.mxu0 0.0
        %1082 = vmatprep.subr.mxu0 0.0
        %1083 = vmatpush1.msra.mxu0 0.0
        %1084 = vmatprep.subr.mxu0 0.0
        %1085 = vmatpush1.msra.mxu0 0.0
        %1086 = vmatprep.subr.mxu0 0.0
        %1087 = vmatpush1.msra.mxu0 0.0
        %1088 = vmatprep.subr.mxu0 0.0
        %1089 = vmatpush1.msra.mxu0 0.0
        %1090 = vmatprep.subr.mxu0 0.0
        %1091 = vmatpush1.msra.mxu0 0.0
        %1092 = vmatprep.subr.mxu0 0.0
        %1093 = vmatpush1.msra.mxu0 0.0
        %1094 = vmatprep.subr.mxu0 0.0
        %1095 = vmatpush1.msra.mxu0 0.0
        %1096 = vmatprep.subr.mxu0 0.0
        %1097 = vmatpush1.msra.mxu0 0.0
        %1098 = vmatprep.subr.mxu0 0.0
        %1099 = vmatpush1.msra.mxu0 0.0
        %1100 = vmatprep.subr.mxu0 0.0
        %1101 = vmatpush1.msra.mxu0 0.0
        %1102 = vmatprep.subr.mxu0 0.0
        %1103 = vmatpush1.msra.mxu0 0.0
        %1104 = vmatprep.subr.mxu0 0.0
        %1105 = vmatpush1.msra.mxu0 0.0
        %1106 = vmatprep.subr.mxu0 0.0
        %1107 = vmatpush1.msra.mxu0 0.0
        %1108 = vmatprep.subr.mxu0 0.0
        %1109 = vmatpush1.msra.mxu0 0.0
        %1110 = vmatprep.subr.mxu0 0.0
        %1111 = vmatpush1.msra.mxu0 0.0
        %1112 = vmatprep.subr.mxu0 0.0
        %1113 = vmatpush1.msra.mxu0 0.0
        %1114 = vmatprep.subr.mxu0 0.0
        %1115 = vmatpush1.msra.mxu0 0.0
        %1116 = vmatprep.subr.mxu0 0.0
        %1117 = vmatpush1.msra.mxu0 0.0
        %1118 = vmatprep.subr.mxu0 0.0
        %1119 = vmatpush1.msra.mxu0 0.0
        %1120 = vmatprep.subr.mxu0 0.0
        %1121 = vmatpush1.msra.mxu0 0.0
        %1122 = vmatprep.subr.mxu0 0.0
        %1123 = vmatpush1.msra.mxu0 0.0
        %1124 = vmatprep.subr.mxu0 0.0
        %1125 = vmatpush1.msra.mxu0 0.0
        %1126 = vmatprep.subr.mxu0 0.0
        %1127 = vmatpush1.msra.mxu0 0.0
        %1128 = vmatprep.subr.mxu0 0.0
        %1129 = vmatpush1.msra.mxu0 0.0
        %1130 = vmatprep.subr.mxu0 0.0
        %1131 = vmatpush1.msra.mxu0 0.0
        %1132 = vmatprep.subr.mxu0 0.0
        %1133 = vmatpush1.msra.mxu0 0.0
        %1134 = vmatprep.subr.mxu0 0.0
        %1135 = vmatpush1.msra.mxu0 0.0
        %1136 = vmatprep.subr.mxu0 0.0
        %1137 = vmatpush1.msra.mxu0 0.0
        %1138 = vmatprep.mubr.f32.mxu0 0.0
        %1139 = vmatmul.mubr.f32.gmra.mrb[0].mxu0 %v1072
        %v1140 = vpop.f32.mrb[0].mxu0
        %v1141 = vadd.f32 %v1068, %v1140
        %v1142 = vpop.f32.mrb[0].mxu0
        %1143 = vdwg.mxu0
        %1144 = vrot.lane.b32.xlu0 %v552, 112
        %v1145 = vpop.permute.xlu0 %1144
        %1146 = vrot.lane.b32.xlu0 %v639, 112
        %v1147 = vpop.permute.xlu0 %1146
        %1148 = vrot.lane.b32.xlu0 %v644, 112
        %v1149 = vpop.permute.xlu0 %1148
        %v1150 = vsel %vm651, %v1145, 0
        %v1152 = vsel %vm651, %v1147, 0
        %v1154 = vsel %vm651, %v1149, 0
        %1156 = vmatprep.subr.mxu0 0.0
        %1157 = vmatpush1.xpose.msra.mxu0 %v1152
        %1158 = vmatprep.subr.mxu0 0.0
        %1159 = vmatpush1.xpose.msra.mxu0 %v1154
        %1160 = vmatprep.subr.mxu0 0.0
        %1161 = vmatpush1.xpose.msra.mxu0 0.0
        %1162 = vmatprep.subr.mxu0 0.0
        %1163 = vmatpush1.xpose.msra.mxu0 0.0
        %1164 = vmatprep.subr.mxu0 0.0
        %1165 = vmatpush1.xpose.msra.mxu0 0.0
        %1166 = vmatprep.subr.mxu0 0.0
        %1167 = vmatpush1.xpose.msra.mxu0 0.0
        %1168 = vmatprep.subr.mxu0 0.0
        %1169 = vmatpush1.xpose.msra.mxu0 0.0
        %1170 = vmatprep.subr.mxu0 0.0
        %1171 = vmatpush1.xpose.msra.mxu0 0.0
        %1172 = vmatprep.subr.mxu0 0.0
        %1173 = vmatpush1.xpose.msra.mxu0 0.0
        %1174 = vmatprep.subr.mxu0 0.0
        %1175 = vmatpush1.xpose.msra.mxu0 0.0
        %1176 = vmatprep.subr.mxu0 0.0
        %1177 = vmatpush1.xpose.msra.mxu0 0.0
        %1178 = vmatprep.subr.mxu0 0.0
        %1179 = vmatpush1.xpose.msra.mxu0 0.0
        %1180 = vmatprep.subr.mxu0 0.0
        %1181 = vmatpush1.xpose.msra.mxu0 0.0
        %1182 = vmatprep.subr.mxu0 0.0
        %1183 = vmatpush1.xpose.msra.mxu0 0.0
        %1184 = vmatprep.subr.mxu0 0.0
        %1185 = vmatpush1.xpose.msra.mxu0 0.0
        %1186 = vmatprep.subr.mxu0 0.0
        %1187 = vmatpush1.xpose.msra.mxu0 0.0
        %1188 = vmatprep.subr.mxu0 0.0
        %1189 = vmatpush1.xpose.msra.mxu0 0.0
        %1190 = vmatprep.subr.mxu0 0.0
        %1191 = vmatpush1.xpose.msra.mxu0 0.0
        %1192 = vmatprep.subr.mxu0 0.0
        %1193 = vmatpush1.xpose.msra.mxu0 0.0
        %1194 = vmatprep.subr.mxu0 0.0
        %1195 = vmatpush1.xpose.msra.mxu0 0.0
        %1196 = vmatprep.subr.mxu0 0.0
        %1197 = vmatpush1.xpose.msra.mxu0 0.0
        %1198 = vmatprep.subr.mxu0 0.0
        %1199 = vmatpush1.xpose.msra.mxu0 0.0
        %1200 = vmatprep.subr.mxu0 0.0
        %1201 = vmatpush1.xpose.msra.mxu0 0.0
        %1202 = vmatprep.subr.mxu0 0.0
        %1203 = vmatpush1.xpose.msra.mxu0 0.0
        %1204 = vmatprep.subr.mxu0 0.0
        %1205 = vmatpush1.xpose.msra.mxu0 0.0
        %1206 = vmatprep.subr.mxu0 0.0
        %1207 = vmatpush1.xpose.msra.mxu0 0.0
        %1208 = vmatprep.subr.mxu0 0.0
        %1209 = vmatpush1.xpose.msra.mxu0 0.0
        %1210 = vmatprep.subr.mxu0 0.0
        %1211 = vmatpush1.xpose.msra.mxu0 0.0
        %1212 = vmatprep.subr.mxu0 0.0
        %1213 = vmatpush1.xpose.msra.mxu0 0.0
        %1214 = vmatprep.subr.mxu0 0.0
        %1215 = vmatpush1.xpose.msra.mxu0 0.0
        %1216 = vmatprep.subr.mxu0 0.0
        %1217 = vmatpush1.xpose.msra.mxu0 0.0
        %1218 = vmatprep.subr.mxu0 0.0
        %1219 = vmatpush1.xpose.msra.mxu0 0.0
        %1220 = vmatprep.mubr.f32.mxu0 0.0
        %1221 = vmatmul.mubr.f32.gmra.mrb[0].mxu0 %v1150
        %v1222 = vpop.f32.mrb[0].mxu0
        %v1223 = vadd.f32 0.0, %v1222
        %v1224 = vpop.f32.mrb[0].mxu0
        %1225 = vdwg.mxu0
        %v1226 = vmul.f32 %v1223, 0.35355338
        %v1227 = vadd.f32 %v907, %v1226
        %v1228 = vsel %vm733, %v1226, -inf
        %1229 = vmax.xlane.f32.xlu0 %v1228
        %v1230 = vpop.xlane.xlu0 %1229
        %v1231 = vsub.f32 %v1226, %v1230
        %v1232 = vmul.f32 %v1231, 1.442695
        %v1233 = vpow.pop %v1232
        %v1234 = vsel %vm733, %v1233, 0.0
        %1235 = vadd.xlane.f32.xlu0 %v1234
        %v1236 = vpop.xlane.xlu0 %1235
        %v1237 = vrcp.pop %v1236
        %v1238 = vmul.f32 %v1233, %v1237
        %1239 = vrot.lane.b32.xlu0 %v639, 80
        %v1240 = vpop.permute.xlu0 %1239
        %1241 = vrot.lane.b32.xlu0 %v644, 80
        %v1242 = vpop.permute.xlu0 %1241
        %v1246 = vsel %vm733, %v1238, 0
        %1248 = vmatprep.subr.mxu0 0.0
        %1249 = vmatpush1.msra.mxu0 %v1240
        %1250 = vmatprep.subr.mxu0 0.0
        %1251 = vmatpush1.msra.mxu0 %v1242
        %1252 = vmatprep.subr.mxu0 0.0
        %1253 = vmatpush1.msra.mxu0 0.0
        %1254 = vmatprep.subr.mxu0 0.0
        %1255 = vmatpush1.msra.mxu0 0.0
        %1256 = vmatprep.subr.mxu0 0.0
        %1257 = vmatpush1.msra.mxu0 0.0
        %1258 = vmatprep.subr.mxu0 0.0
        %1259 = vmatpush1.msra.mxu0 0.0
        %1260 = vmatprep.subr.mxu0 0.0
        %1261 = vmatpush1.msra.mxu0 0.0
        %1262 = vmatprep.subr.mxu0 0.0
        %1263 = vmatpush1.msra.mxu0 0.0
        %1264 = vmatprep.subr.mxu0 0.0
        %1265 = vmatpush1.msra.mxu0 0.0
        %1266 = vmatprep.subr.mxu0 0.0
        %1267 = vmatpush1.msra.mxu0 0.0
        %1268 = vmatprep.subr.mxu0 0.0
        %1269 = vmatpush1.msra.mxu0 0.0
        %1270 = vmatprep.subr.mxu0 0.0
        %1271 = vmatpush1.msra.mxu0 0.0
        %1272 = vmatprep.subr.mxu0 0.0
        %1273 = vmatpush1.msra.mxu0 0.0
        %1274 = vmatprep.subr.mxu0 0.0
        %1275 = vmatpush1.msra.mxu0 0.0
        %1276 = vmatprep.subr.mxu0 0.0
        %1277 = vmatpush1.msra.mxu0 0.0
        %1278 = vmatprep.subr.mxu0 0.0
        %1279 = vmatpush1.msra.mxu0 0.0
        %1280 = vmatprep.subr.mxu0 0.0
        %1281 = vmatpush1.msra.mxu0 0.0
        %1282 = vmatprep.subr.mxu0 0.0
        %1283 = vmatpush1.msra.mxu0 0.0
        %1284 = vmatprep.subr.mxu0 0.0
        %1285 = vmatpush1.msra.mxu0 0.0
        %1286 = vmatprep.subr.mxu0 0.0
        %1287 = vmatpush1.msra.mxu0 0.0
        %1288 = vmatprep.subr.mxu0 0.0
        %1289 = vmatpush1.msra.mxu0 0.0
        %1290 = vmatprep.subr.mxu0 0.0
        %1291 = vmatpush1.msra.mxu0 0.0
        %1292 = vmatprep.subr.mxu0 0.0
        %1293 = vmatpush1.msra.mxu0 0.0
        %1294 = vmatprep.subr.mxu0 0.0
        %1295 = vmatpush1.msra.mxu0 0.0
        %1296 = vmatprep.subr.mxu0 0.0
        %1297 = vmatpush1.msra.mxu0 0.0
        %1298 = vmatprep.subr.mxu0 0.0
        %1299 = vmatpush1.msra.mxu0 0.0
        %1300 = vmatprep.subr.mxu0 0.0
        %1301 = vmatpush1.msra.mxu0 0.0
        %1302 = vmatprep.subr.mxu0 0.0
        %1303 = vmatpush1.msra.mxu0 0.0
        %1304 = vmatprep.subr.mxu0 0.0
        %1305 = vmatpush1.msra.mxu0 0.0
        %1306 = vmatprep.subr.mxu0 0.0
        %1307 = vmatpush1.msra.mxu0 0.0
        %1308 = vmatprep.subr.mxu0 0.0
        %1309 = vmatpush1.msra.mxu0 0.0
        %1310 = vmatprep.subr.mxu0 0.0
        %1311 = vmatpush1.msra.mxu0 0.0
        %1312 = vmatprep.mubr.f32.mxu0 0.0
        %1313 = vmatmul.mubr.f32.gmra.mrb[0].mxu0 %v1246
        %v1314 = vpop.f32.mrb[0].mxu0
        %v1315 = vadd.f32 0.0, %v1314
        %v1316 = vpop.f32.mrb[0].mxu0
        %1317 = vdwg.mxu0
        %v1319 = vsel %vm651, %v1315, 0
        %1321 = vmatprep.subr.mxu0 0.0
        %1322 = vmatpush1.msra.mxu0 %v649
        %1323 = vmatprep.subr.mxu0 0.0
        %1324 = vmatpush1.msra.mxu0 0.0
        %1325 = vmatprep.subr.mxu0 0.0
        %1326 = vmatpush1.msra.mxu0 0.0
        %1327 = vmatprep.subr.mxu0 0.0
        %1328 = vmatpush1.msra.mxu0 0.0
        %1329 = vmatprep.subr.mxu0 0.0
        %1330 = vmatpush1.msra.mxu0 0.0
        %1331 = vmatprep.subr.mxu0 0.0
        %1332 = vmatpush1.msra.mxu0 0.0
        %1333 = vmatprep.subr.mxu0 0.0
        %1334 = vmatpush1.msra.mxu0 0.0
        %1335 = vmatprep.subr.mxu0 0.0
        %1336 = vmatpush1.msra.mxu0 0.0
        %1337 = vmatprep.subr.mxu0 0.0
        %1338 = vmatpush1.msra.mxu0 0.0
        %1339 = vmatprep.subr.mxu0 0.0
        %1340 = vmatpush1.msra.mxu0 0.0
        %1341 = vmatprep.subr.mxu0 0.0
        %1342 = vmatpush1.msra.mxu0 0.0
        %1343 = vmatprep.subr.mxu0 0.0
        %1344 = vmatpush1.msra.mxu0 0.0
        %1345 = vmatprep.subr.mxu0 0.0
        %1346 = vmatpush1.msra.mxu0 0.0
        %1347 = vmatprep.subr.mxu0 0.0
        %1348 = vmatpush1.msra.mxu0 0.0
        %1349 = vmatprep.subr.mxu0 0.0
        %1350 = vmatpush1.msra.mxu0 0.0
        %1351 = vmatprep.subr.mxu0 0.0
        %1352 = vmatpush1.msra.mxu0 0.0
        %1353 = vmatprep.subr.mxu0 0.0
        %1354 = vmatpush1.msra.mxu0 0.0
        %1355 = vmatprep.subr.mxu0 0.0
        %1356 = vmatpush1.msra.mxu0 0.0
        %1357 = vmatprep.subr.mxu0 0.0
        %1358 = vmatpush1.msra.mxu0 0.0
        %1359 = vmatprep.subr.mxu0 0.0
        %1360 = vmatpush1.msra.mxu0 0.0
        %1361 = vmatprep.subr.mxu0 0.0
        %1362 = vmatpush1.msra.mxu0 0.0
        %1363 = vmatprep.subr.mxu0 0.0
        %1364 = vmatpush1.msra.mxu0 0.0
        %1365 = vmatprep.subr.mxu0 0.0
        %1366 = vmatpush1.msra.mxu0 0.0
        %1367 = vmatprep.subr.mxu0 0.0
        %1368 = vmatpush1.msra.mxu0 0.0
        %1369 = vmatprep.subr.mxu0 0.0
        %1370 = vmatpush1.msra.mxu0 0.0
        %1371 = vmatprep.subr.mxu0 0.0
        %1372 = vmatpush1.msra.mxu0 0.0
        %1373 = vmatprep.subr.mxu0 0.0
        %1374 = vmatpush1.msra.mxu0 0.0
        %1375 = vmatprep.subr.mxu0 0.0
        %1376 = vmatpush1.msra.mxu0 0.0
        %1377 = vmatprep.subr.mxu0 0.0
        %1378 = vmatpush1.msra.mxu0 0.0
        %1379 = vmatprep.subr.mxu0 0.0
        %1380 = vmatpush1.msra.mxu0 0.0
        %1381 = vmatprep.subr.mxu0 0.0
        %1382 = vmatpush1.msra.mxu0 0.0
        %1383 = vmatprep.subr.mxu0 0.0
        %1384 = vmatpush1.msra.mxu0 0.0
        %1385 = vmatprep.mubr.f32.mxu0 0.0
        %1386 = vmatmul.mubr.f32.gmra.mrb[0].mxu0 %v1319
        %v1387 = vpop.f32.mrb[0].mxu0
        %v1388 = vadd.f32 0.0, %v1387
        %v1389 = vpop.f32.mrb[0].mxu0
        %1390 = vdwg.mxu0
        %v1391 = vadd.f32 %v1141, %v1388
        %1392 = vrot.lane.b32.xlu0 %v552, 104
        %v1393 = vpop.permute.xlu0 %1392
        %1394 = vrot.lane.b32.xlu0 %v639, 104
        %v1395 = vpop.permute.xlu0 %1394
        %1396 = vrot.lane.b32.xlu0 %v644, 104
        %v1397 = vpop.permute.xlu0 %1396
        %v1398 = vsel %vm651, %v1393, 0
        %v1400 = vsel %vm651, %v1395, 0
        %v1402 = vsel %vm651, %v1397, 0
        %1404 = vmatprep.subr.mxu0 0.0
        %1405 = vmatpush1.xpose.msra.mxu0 %v1400
        %1406 = vmatprep.subr.mxu0 0.0
        %1407 = vmatpush1.xpose.msra.mxu0 %v1402
        %1408 = vmatprep.subr.mxu0 0.0
        %1409 = vmatpush1.xpose.msra.mxu0 0.0
        %1410 = vmatprep.subr.mxu0 0.0
        %1411 = vmatpush1.xpose.msra.mxu0 0.0
        %1412 = vmatprep.subr.mxu0 0.0
        %1413 = vmatpush1.xpose.msra.mxu0 0.0
        %1414 = vmatprep.subr.mxu0 0.0
        %1415 = vmatpush1.xpose.msra.mxu0 0.0
        %1416 = vmatprep.subr.mxu0 0.0
        %1417 = vmatpush1.xpose.msra.mxu0 0.0
        %1418 = vmatprep.subr.mxu0 0.0
        %1419 = vmatpush1.xpose.msra.mxu0 0.0
        %1420 = vmatprep.subr.mxu0 0.0
        %1421 = vmatpush1.xpose.msra.mxu0 0.0
        %1422 = vmatprep.subr.mxu0 0.0
        %1423 = vmatpush1.xpose.msra.mxu0 0.0
        %1424 = vmatprep.subr.mxu0 0.0
        %1425 = vmatpush1.xpose.msra.mxu0 0.0
        %1426 = vmatprep.subr.mxu0 0.0
        %1427 = vmatpush1.xpose.msra.mxu0 0.0
        %1428 = vmatprep.subr.mxu0 0.0
        %1429 = vmatpush1.xpose.msra.mxu0 0.0
        %1430 = vmatprep.subr.mxu0 0.0
        %1431 = vmatpush1.xpose.msra.mxu0 0.0
        %1432 = vmatprep.subr.mxu0 0.0
        %1433 = vmatpush1.xpose.msra.mxu0 0.0
        %1434 = vmatprep.subr.mxu0 0.0
        %1435 = vmatpush1.xpose.msra.mxu0 0.0
        %1436 = vmatprep.subr.mxu0 0.0
        %1437 = vmatpush1.xpose.msra.mxu0 0.0
        %1438 = vmatprep.subr.mxu0 0.0
        %1439 = vmatpush1.xpose.msra.mxu0 0.0
        %1440 = vmatprep.subr.mxu0 0.0
        %1441 = vmatpush1.xpose.msra.mxu0 0.0
        %1442 = vmatprep.subr.mxu0 0.0
        %1443 = vmatpush1.xpose.msra.mxu0 0.0
        %1444 = vmatprep.subr.mxu0 0.0
        %1445 = vmatpush1.xpose.msra.mxu0 0.0
        %1446 = vmatprep.subr.mxu0 0.0
        %1447 = vmatpush1.xpose.msra.mxu0 0.0
        %1448 = vmatprep.subr.mxu0 0.0
        %1449 = vmatpush1.xpose.msra.mxu0 0.0
        %1450 = vmatprep.subr.mxu0 0.0
        %1451 = vmatpush1.xpose.msra.mxu0 0.0
        %1452 = vmatprep.subr.mxu0 0.0
        %1453 = vmatpush1.xpose.msra.mxu0 0.0
        %1454 = vmatprep.subr.mxu0 0.0
        %1455 = vmatpush1.xpose.msra.mxu0 0.0
        %1456 = vmatprep.subr.mxu0 0.0
        %1457 = vmatpush1.xpose.msra.mxu0 0.0
        %1458 = vmatprep.subr.mxu0 0.0
        %1459 = vmatpush1.xpose.msra.mxu0 0.0
        %1460 = vmatprep.subr.mxu0 0.0
        %1461 = vmatpush1.xpose.msra.mxu0 0.0
        %1462 = vmatprep.subr.mxu0 0.0
        %1463 = vmatpush1.xpose.msra.mxu0 0.0
        %1464 = vmatprep.subr.mxu0 0.0
        %1465 = vmatpush1.xpose.msra.mxu0 0.0
        %1466 = vmatprep.subr.mxu0 0.0
        %1467 = vmatpush1.xpose.msra.mxu0 0.0
        %1468 = vmatprep.mubr.f32.mxu0 0.0
        %1469 = vmatmul.mubr.f32.gmra.mrb[0].mxu0 %v1398
        %v1470 = vpop.f32.mrb[0].mxu0
        %v1471 = vadd.f32 0.0, %v1470
        %v1472 = vpop.f32.mrb[0].mxu0
        %1473 = vdwg.mxu0
        %v1474 = vmul.f32 %v1471, 0.35355338
        %v1475 = vadd.f32 %v1227, %v1474
        %v1476 = vsel %vm733, %v1474, -inf
        %1477 = vmax.xlane.f32.xlu0 %v1476
        %v1478 = vpop.xlane.xlu0 %1477
        %v1479 = vsub.f32 %v1474, %v1478
        %v1480 = vmul.f32 %v1479, 1.442695
        %v1481 = vpow.pop %v1480
        %v1482 = vsel %vm733, %v1481, 0.0
        %1483 = vadd.xlane.f32.xlu0 %v1482
        %v1484 = vpop.xlane.xlu0 %1483
        %v1485 = vrcp.pop %v1484
        %v1486 = vmul.f32 %v1481, %v1485
        %1487 = vrot.lane.b32.xlu0 %v639, 72
        %v1488 = vpop.permute.xlu0 %1487
        %1489 = vrot.lane.b32.xlu0 %v644, 72
        %v1490 = vpop.permute.xlu0 %1489
        %v1494 = vsel %vm733, %v1486, 0
        %1496 = vmatprep.subr.mxu0 0.0
        %1497 = vmatpush1.msra.mxu0 %v1488
        %1498 = vmatprep.subr.mxu0 0.0
        %1499 = vmatpush1.msra.mxu0 %v1490
        %1500 = vmatprep.subr.mxu0 0.0
        %1501 = vmatpush1.msra.mxu0 0.0
        %1502 = vmatprep.subr.mxu0 0.0
        %1503 = vmatpush1.msra.mxu0 0.0
        %1504 = vmatprep.subr.mxu0 0.0
        %1505 = vmatpush1.msra.mxu0 0.0
        %1506 = vmatprep.subr.mxu0 0.0
        %1507 = vmatpush1.msra.mxu0 0.0
        %1508 = vmatprep.subr.mxu0 0.0
        %1509 = vmatpush1.msra.mxu0 0.0
        %1510 = vmatprep.subr.mxu0 0.0
        %1511 = vmatpush1.msra.mxu0 0.0
        %1512 = vmatprep.subr.mxu0 0.0
        %1513 = vmatpush1.msra.mxu0 0.0
        %1514 = vmatprep.subr.mxu0 0.0
        %1515 = vmatpush1.msra.mxu0 0.0
        %1516 = vmatprep.subr.mxu0 0.0
        %1517 = vmatpush1.msra.mxu0 0.0
        %1518 = vmatprep.subr.mxu0 0.0
        %1519 = vmatpush1.msra.mxu0 0.0
        %1520 = vmatprep.subr.mxu0 0.0
        %1521 = vmatpush1.msra.mxu0 0.0
        %1522 = vmatprep.subr.mxu0 0.0
        %1523 = vmatpush1.msra.mxu0 0.0
        %1524 = vmatprep.subr.mxu0 0.0
        %1525 = vmatpush1.msra.mxu0 0.0
        %1526 = vmatprep.subr.mxu0 0.0
        %1527 = vmatpush1.msra.mxu0 0.0
        %1528 = vmatprep.subr.mxu0 0.0
        %1529 = vmatpush1.msra.mxu0 0.0
        %1530 = vmatprep.subr.mxu0 0.0
        %1531 = vmatpush1.msra.mxu0 0.0
        %1532 = vmatprep.subr.mxu0 0.0
        %1533 = vmatpush1.msra.mxu0 0.0
        %1534 = vmatprep.subr.mxu0 0.0
        %1535 = vmatpush1.msra.mxu0 0.0
        %1536 = vmatprep.subr.mxu0 0.0
        %1537 = vmatpush1.msra.mxu0 0.0
        %1538 = vmatprep.subr.mxu0 0.0
        %1539 = vmatpush1.msra.mxu0 0.0
        %1540 = vmatprep.subr.mxu0 0.0
        %1541 = vmatpush1.msra.mxu0 0.0
        %1542 = vmatprep.subr.mxu0 0.0
        %1543 = vmatpush1.msra.mxu0 0.0
        %1544 = vmatprep.subr.mxu0 0.0
        %1545 = vmatpush1.msra.mxu0 0.0
        %1546 = vmatprep.subr.mxu0 0.0
        %1547 = vmatpush1.msra.mxu0 0.0
        %1548 = vmatprep.subr.mxu0 0.0
        %1549 = vmatpush1.msra.mxu0 0.0
        %1550 = vmatprep.subr.mxu0 0.0
        %1551 = vmatpush1.msra.mxu0 0.0
        %1552 = vmatprep.subr.mxu0 0.0
        %1553 = vmatpush1.msra.mxu0 0.0
        %1554 = vmatprep.subr.mxu0 0.0
        %1555 = vmatpush1.msra.mxu0 0.0
        %1556 = vmatprep.subr.mxu0 0.0
        %1557 = vmatpush1.msra.mxu0 0.0
        %1558 = vmatprep.subr.mxu0 0.0
        %1559 = vmatpush1.msra.mxu0 0.0
        %1560 = vmatprep.mubr.f32.mxu0 0.0
        %1561 = vmatmul.mubr.f32.gmra.mrb[0].mxu0 %v1494
        %v1562 = vpop.f32.mrb[0].mxu0
        %v1563 = vadd.f32 0.0, %v1562
        %v1564 = vpop.f32.mrb[0].mxu0
        %1565 = vdwg.mxu0
        %v1567 = vsel %vm651, %v1563, 0
        %1569 = vmatprep.subr.mxu0 0.0
        %1570 = vmatpush1.msra.mxu0 %v650
        %1571 = vmatprep.subr.mxu0 0.0
        %1572 = vmatpush1.msra.mxu0 0.0
        %1573 = vmatprep.subr.mxu0 0.0
        %1574 = vmatpush1.msra.mxu0 0.0
        %1575 = vmatprep.subr.mxu0 0.0
        %1576 = vmatpush1.msra.mxu0 0.0
        %1577 = vmatprep.subr.mxu0 0.0
        %1578 = vmatpush1.msra.mxu0 0.0
        %1579 = vmatprep.subr.mxu0 0.0
        %1580 = vmatpush1.msra.mxu0 0.0
        %1581 = vmatprep.subr.mxu0 0.0
        %1582 = vmatpush1.msra.mxu0 0.0
        %1583 = vmatprep.subr.mxu0 0.0
        %1584 = vmatpush1.msra.mxu0 0.0
        %1585 = vmatprep.subr.mxu0 0.0
        %1586 = vmatpush1.msra.mxu0 0.0
        %1587 = vmatprep.subr.mxu0 0.0
        %1588 = vmatpush1.msra.mxu0 0.0
        %1589 = vmatprep.subr.mxu0 0.0
        %1590 = vmatpush1.msra.mxu0 0.0
        %1591 = vmatprep.subr.mxu0 0.0
        %1592 = vmatpush1.msra.mxu0 0.0
        %1593 = vmatprep.subr.mxu0 0.0
        %1594 = vmatpush1.msra.mxu0 0.0
        %1595 = vmatprep.subr.mxu0 0.0
        %1596 = vmatpush1.msra.mxu0 0.0
        %1597 = vmatprep.subr.mxu0 0.0
        %1598 = vmatpush1.msra.mxu0 0.0
        %1599 = vmatprep.subr.mxu0 0.0
        %1600 = vmatpush1.msra.mxu0 0.0
        %1601 = vmatprep.subr.mxu0 0.0
        %1602 = vmatpush1.msra.mxu0 0.0
        %1603 = vmatprep.subr.mxu0 0.0
        %1604 = vmatpush1.msra.mxu0 0.0
        %1605 = vmatprep.subr.mxu0 0.0
        %1606 = vmatpush1.msra.mxu0 0.0
        %1607 = vmatprep.subr.mxu0 0.0
        %1608 = vmatpush1.msra.mxu0 0.0
        %1609 = vmatprep.subr.mxu0 0.0
        %1610 = vmatpush1.msra.mxu0 0.0
        %1611 = vmatprep.subr.mxu0 0.0
        %1612 = vmatpush1.msra.mxu0 0.0
        %1613 = vmatprep.subr.mxu0 0.0
        %1614 = vmatpush1.msra.mxu0 0.0
        %1615 = vmatprep.subr.mxu0 0.0
        %1616 = vmatpush1.msra.mxu0 0.0
        %1617 = vmatprep.subr.mxu0 0.0
        %1618 = vmatpush1.msra.mxu0 0.0
        %1619 = vmatprep.subr.mxu0 0.0
        %1620 = vmatpush1.msra.mxu0 0.0
        %1621 = vmatprep.subr.mxu0 0.0
        %1622 = vmatpush1.msra.mxu0 0.0
        %1623 = vmatprep.subr.mxu0 0.0
        %1624 = vmatpush1.msra.mxu0 0.0
        %1625 = vmatprep.subr.mxu0 0.0
        %1626 = vmatpush1.msra.mxu0 0.0
        %1627 = vmatprep.subr.mxu0 0.0
        %1628 = vmatpush1.msra.mxu0 0.0
        %1629 = vmatprep.subr.mxu0 0.0
        %1630 = vmatpush1.msra.mxu0 0.0
        %1631 = vmatprep.subr.mxu0 0.0
        %1632 = vmatpush1.msra.mxu0 0.0
        %1633 = vmatprep.mubr.f32.mxu0 0.0
        %1634 = vmatmul.mubr.f32.gmra.mrb[0].mxu0 %v1567
        %v1635 = vpop.f32.mrb[0].mxu0
        %v1636 = vadd.f32 0.0, %v1635
        %v1637 = vpop.f32.mrb[0].mxu0
        %1638 = vdwg.mxu0
        %v1639 = vadd.f32 %v1391, %v1636
        %v1640 = vld [vmem:[%s7] sm:$0x1]
        %v1642 = vlaneseq
        %v1643 = vshrl.u32 %v1642, 7
        %v1644 = vsub.s32 0, %v1643
        %v1645 = vrot.slane %v1640, %v1644
        %v1647 = vadd.f32 %v1639, %v1645
        %v1648 = vld [vmem:[%s8] sm:$0xff]
        %v1649 = vld [vmem:[%s8 + $0x8] sm:$0xff]
        %v1650 = vld [vmem:[%s8 + $0x10] sm:$0xff]
        %v1651 = vld [vmem:[%s8 + $0x18] sm:$0xff]
        %v1652 = vld [vmem:[%s8 + $0x20] sm:$0xff]
        %v1653 = vld [vmem:[%s8 + $0x28] sm:$0xff]
        %v1654 = vld [vmem:[%s8 + $0x30] sm:$0xff]
        %v1655 = vld [vmem:[%s8 + $0x38] sm:$0xff]
        %v1657 = vsel %vm481, %v1647, 0
        %1659 = vmatprep.subr.mxu0 0.0
        %1660 = vmatpush1.msra.mxu0 %v1652
        %1661 = vmatprep.subr.mxu0 0.0
        %1662 = vmatpush1.msra.mxu0 %v1653
        %1663 = vmatprep.subr.mxu0 0.0
        %1664 = vmatpush1.msra.mxu0 %v1654
        %1665 = vmatprep.subr.mxu0 0.0
        %1666 = vmatpush1.msra.mxu0 %v1655
        %1667 = vmatprep.subr.mxu0 0.0
        %1668 = vmatpush1.msra.mxu0 0.0
        %1669 = vmatprep.subr.mxu0 0.0
        %1670 = vmatpush1.msra.mxu0 0.0
        %1671 = vmatprep.subr.mxu0 0.0
        %1672 = vmatpush1.msra.mxu0 0.0
        %1673 = vmatprep.subr.mxu0 0.0
        %1674 = vmatpush1.msra.mxu0 0.0
        %1675 = vmatprep.subr.mxu0 0.0
        %1676 = vmatpush1.msra.mxu0 0.0
        %1677 = vmatprep.subr.mxu0 0.0
        %1678 = vmatpush1.msra.mxu0 0.0
        %1679 = vmatprep.subr.mxu0 0.0
        %1680 = vmatpush1.msra.mxu0 0.0
        %1681 = vmatprep.subr.mxu0 0.0
        %1682 = vmatpush1.msra.mxu0 0.0
        %1683 = vmatprep.subr.mxu0 0.0
        %1684 = vmatpush1.msra.mxu0 0.0
        %1685 = vmatprep.subr.mxu0 0.0
        %1686 = vmatpush1.msra.mxu0 0.0
        %1687 = vmatprep.subr.mxu0 0.0
        %1688 = vmatpush1.msra.mxu0 0.0
        %1689 = vmatprep.subr.mxu0 0.0
        %1690 = vmatpush1.msra.mxu0 0.0
        %1691 = vmatprep.subr.mxu0 0.0
        %1692 = vmatpush1.msra.mxu0 0.0
        %1693 = vmatprep.subr.mxu0 0.0
        %1694 = vmatpush1.msra.mxu0 0.0
        %1695 = vmatprep.subr.mxu0 0.0
        %1696 = vmatpush1.msra.mxu0 0.0
        %1697 = vmatprep.subr.mxu0 0.0
        %1698 = vmatpush1.msra.mxu0 0.0
        %1699 = vmatprep.subr.mxu0 0.0
        %1700 = vmatpush1.msra.mxu0 0.0
        %1701 = vmatprep.subr.mxu0 0.0
        %1702 = vmatpush1.msra.mxu0 0.0
        %1703 = vmatprep.subr.mxu0 0.0
        %1704 = vmatpush1.msra.mxu0 0.0
        %1705 = vmatprep.subr.mxu0 0.0
        %1706 = vmatpush1.msra.mxu0 0.0
        %1707 = vmatprep.subr.mxu0 0.0
        %1708 = vmatpush1.msra.mxu0 0.0
        %1709 = vmatprep.subr.mxu0 0.0
        %1710 = vmatpush1.msra.mxu0 0.0
        %1711 = vmatprep.subr.mxu0 0.0
        %1712 = vmatpush1.msra.mxu0 0.0
        %1713 = vmatprep.subr.mxu0 0.0
        %1714 = vmatpush1.msra.mxu0 0.0
        %1715 = vmatprep.subr.mxu0 0.0
        %1716 = vmatpush1.msra.mxu0 0.0
        %1717 = vmatprep.subr.mxu0 0.0
        %1718 = vmatpush1.msra.mxu0 0.0
        %1719 = vmatprep.subr.mxu0 0.0
        %1720 = vmatpush1.msra.mxu0 0.0
        %1721 = vmatprep.subr.mxu0 0.0
        %1722 = vmatpush1.msra.mxu0 0.0
        %1723 = vmatprep.mubr.f32.mxu0 0.0
        %1724 = vmatmul.mubr.f32.gmra.mrb[0].mxu0 %v1657
        %v1725 = vpop.f32.mrb[0].mxu0
        %v1726 = vadd.f32 0.0, %v1725
        %v1727 = vpop.f32.mrb[0].mxu0
        %1728 = vdwg.mxu0
        %1729 = vmatprep.subr.mxu0 0.0
        %1730 = vmatpush1.msra.mxu0 %v1648
        %1731 = vmatprep.subr.mxu0 0.0
        %1732 = vmatpush1.msra.mxu0 %v1649
        %1733 = vmatprep.subr.mxu0 0.0
        %1734 = vmatpush1.msra.mxu0 %v1650
        %1735 = vmatprep.subr.mxu0 0.0
        %1736 = vmatpush1.msra.mxu0 %v1651
        %1737 = vmatprep.subr.mxu0 0.0
        %1738 = vmatpush1.msra.mxu0 0.0
        %1739 = vmatprep.subr.mxu0 0.0
        %1740 = vmatpush1.msra.mxu0 0.0
        %1741 = vmatprep.subr.mxu0 0.0
        %1742 = vmatpush1.msra.mxu0 0.0
        %1743 = vmatprep.subr.mxu0 0.0
        %1744 = vmatpush1.msra.mxu0 0.0
        %1745 = vmatprep.subr.mxu0 0.0
        %1746 = vmatpush1.msra.mxu0 0.0
        %1747 = vmatprep.subr.mxu0 0.0
        %1748 = vmatpush1.msra.mxu0 0.0
        %1749 = vmatprep.subr.mxu0 0.0
        %1750 = vmatpush1.msra.mxu0 0.0
        %1751 = vmatprep.subr.mxu0 0.0
        %1752 = vmatpush1.msra.mxu0 0.0
        %1753 = vmatprep.subr.mxu0 0.0
        %1754 = vmatpush1.msra.mxu0 0.0
        %1755 = vmatprep.subr.mxu0 0.0
        %1756 = vmatpush1.msra.mxu0 0.0
        %1757 = vmatprep.subr.mxu0 0.0
        %1758 = vmatpush1.msra.mxu0 0.0
        %1759 = vmatprep.subr.mxu0 0.0
        %1760 = vmatpush1.msra.mxu0 0.0
        %1761 = vmatprep.subr.mxu0 0.0
        %1762 = vmatpush1.msra.mxu0 0.0
        %1763 = vmatprep.subr.mxu0 0.0
        %1764 = vmatpush1.msra.mxu0 0.0
        %1765 = vmatprep.subr.mxu0 0.0
        %1766 = vmatpush1.msra.mxu0 0.0
        %1767 = vmatprep.subr.mxu0 0.0
        %1768 = vmatpush1.msra.mxu0 0.0
        %1769 = vmatprep.subr.mxu0 0.0
        %1770 = vmatpush1.msra.mxu0 0.0
        %1771 = vmatprep.subr.mxu0 0.0
        %1772 = vmatpush1.msra.mxu0 0.0
        %1773 = vmatprep.subr.mxu0 0.0
        %1774 = vmatpush1.msra.mxu0 0.0
        %1775 = vmatprep.subr.mxu0 0.0
        %1776 = vmatpush1.msra.mxu0 0.0
        %1777 = vmatprep.subr.mxu0 0.0
        %1778 = vmatpush1.msra.mxu0 0.0
        %1779 = vmatprep.subr.mxu0 0.0
        %1780 = vmatpush1.msra.mxu0 0.0
        %1781 = vmatprep.subr.mxu0 0.0
        %1782 = vmatpush1.msra.mxu0 0.0
        %1783 = vmatprep.subr.mxu0 0.0
        %1784 = vmatpush1.msra.mxu0 0.0
        %1785 = vmatprep.subr.mxu0 0.0
        %1786 = vmatpush1.msra.mxu0 0.0
        %1787 = vmatprep.subr.mxu0 0.0
        %1788 = vmatpush1.msra.mxu0 0.0
        %1789 = vmatprep.subr.mxu0 0.0
        %1790 = vmatpush1.msra.mxu0 0.0
        %1791 = vmatprep.subr.mxu0 0.0
        %1792 = vmatpush1.msra.mxu0 0.0
        %1793 = vmatprep.mubr.f32.mxu0 0.0
        %1794 = vmatmul.mubr.f32.gmra.mrb[0].mxu0 %v483
        %v1795 = vpop.f32.mrb[0].mxu0
        %v1796 = vadd.f32 %v1726, %v1795
        %v1797 = vpop.f32.mrb[0].mxu0
        %1798 = vdwg.mxu0
        %v1799 = vld [vmem:[%s9] sm:$0x1]
        %v1801 = vlaneseq
        %v1802 = vshrl.u32 %v1801, 7
        %v1803 = vsub.s32 0, %v1802
        %v1804 = vrot.slane %v1799, %v1803
        %v1806 = vadd.f32 %v1796, %v1804
        %v1807 = vmax.f32 %v1806, 0.0
        %v1808 = vld [vmem:[%s10] sm:$0xff]
        %v1809 = vld [vmem:[%s10 + $0x8] sm:$0xff]
        %v1810 = vld [vmem:[%s10 + $0x10] sm:$0xff]
        %v1811 = vld [vmem:[%s10 + $0x18] sm:$0xff]
        %v1812 = vld [vmem:[%s10 + $0x20] sm:$0xff]
        %v1813 = vld [vmem:[%s10 + $0x28] sm:$0xff]
        %v1814 = vld [vmem:[%s10 + $0x30] sm:$0xff]
        %v1815 = vld [vmem:[%s10 + $0x38] sm:$0xff]
        %v1816 = vld [vmem:[%s11] sm:$0x1]
        %v1818 = vlaneseq
        %v1819 = vshrl.u32 %v1818, 7
        %v1820 = vsub.s32 0, %v1819
        %v1821 = vrot.slane %v1816, %v1820
        %vm1823 = vcmask 523264
        %v1825 = vsel %vm1823, %v1807, 0
        %1827 = vmatprep.subr.mxu0 0.0
        %1828 = vmatpush1.msra.mxu0 %v1808
        %1829 = vmatprep.subr.mxu0 0.0
        %1830 = vmatpush1.msra.mxu0 %v1809
        %1831 = vmatprep.subr.mxu0 0.0
        %1832 = vmatpush1.msra.mxu0 %v1810
        %1833 = vmatprep.subr.mxu0 0.0
        %1834 = vmatpush1.msra.mxu0 %v1811
        %1835 = vmatprep.subr.mxu0 0.0
        %1836 = vmatpush1.msra.mxu0 %v1812
        %1837 = vmatprep.subr.mxu0 0.0
        %1838 = vmatpush1.msra.mxu0 %v1813
        %1839 = vmatprep.subr.mxu0 0.0
        %1840 = vmatpush1.msra.mxu0 %v1814
        %1841 = vmatprep.subr.mxu0 0.0
        %1842 = vmatpush1.msra.mxu0 %v1815
        %1843 = vmatprep.subr.mxu0 0.0
        %1844 = vmatpush1.msra.mxu0 0.0
        %1845 = vmatprep.subr.mxu0 0.0
        %1846 = vmatpush1.msra.mxu0 0.0
        %1847 = vmatprep.subr.mxu0 0.0
        %1848 = vmatpush1.msra.mxu0 0.0
        %1849 = vmatprep.subr.mxu0 0.0
        %1850 = vmatpush1.msra.mxu0 0.0
        %1851 = vmatprep.subr.mxu0 0.0
        %1852 = vmatpush1.msra.mxu0 0.0
        %1853 = vmatprep.subr.mxu0 0.0
        %1854 = vmatpush1.msra.mxu0 0.0
        %1855 = vmatprep.subr.mxu0 0.0
        %1856 = vmatpush1.msra.mxu0 0.0
        %1857 = vmatprep.subr.mxu0 0.0
        %1858 = vmatpush1.msra.mxu0 0.0
        %1859 = vmatprep.subr.mxu0 0.0
        %1860 = vmatpush1.msra.mxu0 0.0
        %1861 = vmatprep.subr.mxu0 0.0
        %1862 = vmatpush1.msra.mxu0 0.0
        %1863 = vmatprep.subr.mxu0 0.0
        %1864 = vmatpush1.msra.mxu0 0.0
        %1865 = vmatprep.subr.mxu0 0.0
        %1866 = vmatpush1.msra.mxu0 0.0
        %1867 = vmatprep.subr.mxu0 0.0
        %1868 = vmatpush1.msra.mxu0 0.0
        %1869 = vmatprep.subr.mxu0 0.0
        %1870 = vmatpush1.msra.mxu0 0.0
        %1871 = vmatprep.subr.mxu0 0.0
        %1872 = vmatpush1.msra.mxu0 0.0
        %1873 = vmatprep.subr.mxu0 0.0
        %1874 = vmatpush1.msra.mxu0 0.0
        %1875 = vmatprep.subr.mxu0 0.0
        %1876 = vmatpush1.msra.mxu0 0.0
        %1877 = vmatprep.subr.mxu0 0.0
        %1878 = vmatpush1.msra.mxu0 0.0
        %1879 = vmatprep.subr.mxu0 0.0
        %1880 = vmatpush1.msra.mxu0 0.0
        %1881 = vmatprep.subr.mxu0 0.0
        %1882 = vmatpush1.msra.mxu0 0.0
        %1883 = vmatprep.subr.mxu0 0.0
        %1884 = vmatpush1.msra.mxu0 0.0
        %1885 = vmatprep.subr.mxu0 0.0
        %1886 = vmatpush1.msra.mxu0 0.0
        %1887 = vmatprep.subr.mxu0 0.0
        %1888 = vmatpush1.msra.mxu0 0.0
        %1889 = vmatprep.subr.mxu0 0.0
        %1890 = vmatpush1.msra.mxu0 0.0
        %1891 = vmatprep.mubr.f32.mxu0 0.0
        %1892 = vmatmul.mubr.f32.gmra.mrb[0].mxu0 %v1825
        %v1893 = vpop.f32.mrb[0].mxu0
        %v1894 = vadd.f32 %v1821, %v1893
        %v1895 = vpop.f32.mrb[0].mxu0
        %1896 = vdwg.mxu0
        %1897 = vst.msk [vmem:[%s450] sm:$0xff] %vm481, %v1894
        %v1898 = vmul.f32 %v1475, 0.25
        %1899 = vst.msk [vmem:[%s457] sm:$0xff] %vm733, %v1898
        %s1900 = sand.u32 %s301, 1
        %s1901 = scalar_lea.sflag [#allocation3], %s1900
        %s1902 = sand.u32 %s301, 1
        %s1903 = smul.addr %s1902, 8
        %s1904 = scalar_lea.vmem [#allocation2], %s1903
        %s1905 = sand.u32 %s327, 1
        %s1906 = scalar_lea.sflag [#allocation5], %s1905
        %s1907 = sand.u32 %s327, 1
        %s1908 = smul.addr %s1907, 8
        %s1909 = scalar_lea.vmem [#allocation4], %s1908
        // Predicated region
        $region69: #{attentional_propagation.1} parent=67 // pred_check
          %p1910 = pneg %p311
        $region70: #{attentional_propagation.1} parent=67 // pred_check_branch
          %1912 = sbr.rel (%p1910) target = $region72
        $region71: #{attentional_propagation.1} parent=67 // pred_region
          %s1914 = ssub.s32 128, 128
          %1915 = vsyncadd %s1901, %s1914
          %s1916 = smul.addr %s31, 128
          %s1917 = scalar_lea.hbm %s12, %s1916
          %s1919 = sshll.u32 %s1904, 4
          %s1920 = int_to_ptr.vmem [resolvable:$true] %s1919
          %1922 = dma.vmem_to_hbm [thread:$0]  %s1920, 128, %s1917, %s1901
        $region72: #{attentional_propagation.1} parent=67 // pred_fallthru
          _
        // Predicated region
        $region73: #{attentional_propagation.1} parent=67 // pred_check
          %p1923 = pneg %p337
        $region74: #{attentional_propagation.1} parent=67 // pred_check_branch
          %1925 = sbr.rel (%p1923) target = $region76
        $region75: #{attentional_propagation.1} parent=67 // pred_region
          %s1927 = ssub.s32 128, 128
          %1928 = vsyncadd %s1906, %s1927
          %s1929 = smul.addr %s31, 128
          %s1930 = scalar_lea.hbm %s13, %s1929
          %s1932 = sshll.u32 %s1909, 4
          %s1933 = int_to_ptr.vmem [resolvable:$true] %s1932
          %1935 = dma.vmem_to_hbm [thread:$0]  %s1933, 128, %s1930, %s1906
        $region76: #{attentional_propagation.1} parent=67 // pred_fallthru
          _
      $region68: #{attentional_propagation.1} parent=5 // pred_fallthru
        _
      %p1936 = scmp.le.s32.totalorder 2, %s26
      // Predicated region
      $region77: #{attentional_propagation.1} parent=5 // pred_check
        %p1937 = pneg %p1936
      $region78: #{attentional_propagation.1} parent=5 // pred_check_branch
        %1939 = sbr.rel (%p1937) target = $region80
      $region79: #{attentional_propagation.1} parent=5 // pred_region
        %s1940 = ssub.s32 %s26, 2
        // Predicated region
        $region81: #{attentional_propagation.1} parent=79 // pred_check
          %p1941 = pneg %p317
        $region82: #{attentional_propagation.1} parent=79 // pred_check_branch
          %1943 = sbr.rel (%p1941) target = $region84
        $region83: #{attentional_propagation.1} parent=79 // pred_region
          %s1944 = sand.u32 %s302, 1
          %s1945 = scalar_lea.sflag [#allocation3], %s1944
          %s1946 = sand.u32 %s302, 1
          %s1947 = smul.addr %s1946, 8
          %s1948 = scalar_lea.vmem [#allocation2], %s1947
          %1949 = dma.done %s1945, 128
        $region84: #{attentional_propagation.1} parent=79 // pred_fallthru
          _
        // Predicated region
        $region85: #{attentional_propagation.1} parent=79 // pred_check
          %p1950 = pneg %p343
        $region86: #{attentional_propagation.1} parent=79 // pred_check_branch
          %1952 = sbr.rel (%p1950) target = $region88
        $region87: #{attentional_propagation.1} parent=79 // pred_region
          %s1953 = sand.u32 %s328, 1
          %s1954 = scalar_lea.sflag [#allocation5], %s1953
          %s1955 = sand.u32 %s328, 1
          %s1956 = smul.addr %s1955, 8
          %s1957 = scalar_lea.vmem [#allocation4], %s1956
          %1958 = dma.done %s1954, 128
        $region88: #{attentional_propagation.1} parent=79 // pred_fallthru
          _
      $region80: #{attentional_propagation.1} parent=5 // pred_fallthru
        _
    $region6: #{attentional_propagation.1} parent=1 // loop_footer
      %s30 = sadd.s32 1, %s26
    $region7: #{attentional_propagation.1} parent=1 // loop_footer_branch
      %25 = sbr.rel target = $region3
    $region8: #{attentional_propagation.1} parent=1 // loop_exit
      _
    %1959 = vsyncpa [#allocation3], 1
    %s1960 = scalar_lea.sflag [#allocation3], 1
    %1961 = vsyncpa %s1960, 1
    %1962 = vsyncpa [#allocation5], 1
    %s1963 = scalar_lea.sflag [#allocation5], 1
    %1964 = vsyncpa %s1963, 1

</llo_original>
